<compile_context>
chip_gen: v6e
topology: v6e:2x2x1
jax: 0.10.0
libtpu: 0.0.40
codegen_flags: <defaults>
</compile_context>

<pallas_src>
import functools

import numpy as np
import jax
import jax.numpy as jnp
from jax.experimental import pallas as pl
from jax.experimental.pallas import tpu as pltpu


def _round_up(v, m):
    return -(-v // m) * m


def _choose_tile_p(P, dim, w_bytes):
    """Pick a pixel-tile size: big enough to amortize per-step overhead,
    small enough that the (dim^2, tile) weight operand stays ~4 MiB."""
    budget = 4 * 1024 * 1024
    tile = budget // max(1, dim * dim * w_bytes)
    tile = max(128, min(8192, (tile // 128) * 128))
    # No point making the tile (much) larger than the image.
    tile = min(tile, _round_up(P, 128))
    # Keep at least 2 grid steps along the pixel axis when possible so both
    # v7x TensorCores get work even at batch=1.
    if P > 128:
        tile = min(tile, max(128, _round_up(_round_up(P, 128) // 2, 128)))
    return tile


def _trilerp_kernel(x_ref, lut_ref, o_ref, *, dim, inv_binsize, w_dtype, precision):
    x = x_ref[...]                                    # (3, TP) f32, channel-major
    r = x[0:1, :]                                     # (1, TP)
    g = x[1:2, :]
    b = x[2:3, :]

    # id = floor(v * inv_binsize); frac = s - id   (no divisions)
    s_r = r * inv_binsize
    s_g = g * inv_binsize
    s_b = b * inv_binsize
    r_idf = jnp.floor(s_r)
    g_idf = jnp.floor(s_g)
    b_idf = jnp.floor(s_b)
    r_d = s_r - r_idf
    g_d = s_g - g_idf
    b_d = s_b - b_idf
    r_id = r_idf.astype(jnp.int32)                    # (1, TP)
    g_id = g_idf.astype(jnp.int32)
    b_id = b_idf.astype(jnp.int32)

    # Per-axis two-nonzero weight rows, each (dim, TP): row id -> 1-frac,
    # row id+1 -> frac, else 0. O(dim * TP) work.
    iota_d = jax.lax.broadcasted_iota(jnp.int32, (dim, 1), 0)

    def axis_weights(idx, frac):
        d = iota_d - idx                              # (dim, TP)
        return jnp.where(d == 0, 1.0 - frac, jnp.where(d == 1, frac, 0.0))

    w_r = axis_weights(r_id, r_d)                     # (dim, TP) f32
    w_g = axis_weights(g_id, g_d)                     # (dim, TP) f32
    w_b = axis_weights(b_id, b_d)                     # (dim, TP) f32

    # Factorized (b, g)-plane weights: outer product materialized directly in
    # the MXU dtype. Row index = b*dim + g, matching the LUT column layout.
    w_bg = (w_b.astype(w_dtype)[:, None, :] *
            w_g.astype(w_dtype)[None, :, :]).reshape(dim * dim, -1)  # (dim^2, TP)

    # One fused MXU matmul over all 3 channels:
    #   lut (3*dim, dim^2) @ w_bg (dim^2, TP) -> t (3*dim, TP), f32 accumulate.
    t = jnp.dot(lut_ref[...], w_bg,
                preferred_element_type=jnp.float32, precision=precision)

    # r-axis interpolation + single lane-dense store: (3, dim, TP) * (1, dim, TP)
    # summed over the dim axis -> (3, TP).
    o_ref[...] = jnp.sum(t.reshape(3, dim, -1) * w_r[None, :, :],
                         axis=1).astype(o_ref.dtype)


def trilinear_interpolation(lut, x, *, tile_p=None, use_bf16_matmul=True):
    """JAX equivalent of TrilinearInterpolation.forward(lut, x) -> (lut, output).

    use_bf16_matmul=True (default): bf16 MXU operands, f32 accumulation
    (~1e-2 worst-case abs error). use_bf16_matmul=False: f32 operands with
    explicit HIGHEST precision (reference-accurate, slower MXU passes).
    """
    B, C, W, H = x.shape
    assert C == 3, "x must be (B, 3, W, H)"
    dim = lut.shape[-1]
    inv_binsize = (dim - 1) / 1.000001                # python-constant 1/binsize
    P = W * H

    w_dtype = jnp.bfloat16 if use_bf16_matmul else jnp.float32
    w_bytes = 2 if use_bf16_matmul else 4
    if tile_p is None:
        tile_p = _choose_tile_p(P, dim, w_bytes)
    else:
        tile_p = max(128, (int(tile_p) // 128) * 128)
    n_tiles = -(-P // tile_p)

    # LUT (3, dim, dim, dim) [c, b, g, r] -> (3*dim, dim^2) [(c, r), (b, g)].
    lut_mat = jnp.transpose(lut.astype(jnp.float32), (0, 3, 1, 2)) \
                 .reshape(3 * dim, dim * dim)
    if use_bf16_matmul:
        lut_mat = lut_mat.astype(jnp.bfloat16)

    # NCHW -> (B, 3, P): pure reshape, no transpose, no pad. Channels stay on
    # the (full-extent) second-to-last block dim, pixels stay lane-dense.
    x3 = x.astype(jnp.float32).reshape(B, 3, P)

    precision = None if use_bf16_matmul else jax.lax.Precision.HIGHEST
    kernel = functools.partial(_trilerp_kernel, dim=dim, inv_binsize=inv_binsize,
                               w_dtype=w_dtype, precision=precision)

    out3 = pl.pallas_call(
        kernel,
        out_shape=jax.ShapeDtypeStruct((B, 3, P), jnp.float32),
        grid_spec=pltpu.PrefetchScalarGridSpec(
            num_scalar_prefetch=0,
            grid=(B, n_tiles),
            in_specs=[
                # batch squeezed; ragged last pixel tile handled by Pallas.
                pl.BlockSpec((None, 3, tile_p), lambda b, i: (b, 0, i)),
                # constant LUT block: same index every step -> no re-DMA.
                pl.BlockSpec((3 * dim, dim * dim), lambda b, i: (0, 0)),
            ],
            out_specs=pl.BlockSpec((None, 3, tile_p), lambda b, i: (b, 0, i)),
        ),
        compiler_params=pltpu.CompilerParams(
            dimension_semantics=("parallel", "parallel"),
            # Explicit scoped-VMEM limit: safe on v5e (16 MiB default scoped),
            # v6e (32 MiB default) and v7x (64 MiB physical); the dim-aware
            # tile budget keeps actual usage well under this.
            vmem_limit_bytes=32 * 1024 * 1024,
        ),
    )(x3, lut_mat)

    out = out3.reshape(B, 3, W, H).astype(x.dtype)
    return lut, out


def _ref_trilerp(lut, x):
    """Pure numpy reference matching the CUDA trilinear.forward semantics."""
    lut = np.asarray(lut, np.float32)
    x = np.asarray(x, np.float32)
    dim = lut.shape[-1]
    binsize = np.float32(1.000001 / (dim - 1))
    B = x.shape[0]
    out = np.zeros_like(x)
    for bi in range(B):
        r, g, b = x[bi, 0], x[bi, 1], x[bi, 2]
        r_id = np.floor(r / binsize).astype(np.int64)
        g_id = np.floor(g / binsize).astype(np.int64)
        b_id = np.floor(b / binsize).astype(np.int64)
        r_d = np.fmod(r, binsize) / binsize
        g_d = np.fmod(g, binsize) / binsize
        b_d = np.fmod(b, binsize) / binsize
        for c in range(3):
            l = lut[c]
            out[bi, c] = (
                (1 - r_d) * (1 - g_d) * (1 - b_d) * l[b_id, g_id, r_id]
                + r_d * (1 - g_d) * (1 - b_d) * l[b_id, g_id, r_id + 1]
                + (1 - r_d) * g_d * (1 - b_d) * l[b_id, g_id + 1, r_id]
                + r_d * g_d * (1 - b_d) * l[b_id, g_id + 1, r_id + 1]
                + (1 - r_d) * (1 - g_d) * b_d * l[b_id + 1, g_id, r_id]
                + r_d * (1 - g_d) * b_d * l[b_id + 1, g_id, r_id + 1]
                + (1 - r_d) * g_d * b_d * l[b_id + 1, g_id + 1, r_id]
                + r_d * g_d * b_d * l[b_id + 1, g_id + 1, r_id + 1]
            )
    return out


if __name__ == "__main__":
    key = jax.random.PRNGKey(0)
    k_x, k_n = jax.random.split(key)

    B, W, H, dim = 2, 16, 16, 9
    x = jax.random.uniform(k_x, (B, 3, W, H), dtype=jnp.float32)

    # Deterministic LUT: identity mapping + small noise. lut[c, b, g, r].
    grid = jnp.linspace(0.0, 1.0, dim, dtype=jnp.float32)
    rr = jnp.broadcast_to(grid[None, None, :], (dim, dim, dim))
    gg = jnp.broadcast_to(grid[None, :, None], (dim, dim, dim))
    bb = jnp.broadcast_to(grid[:, None, None], (dim, dim, dim))
    lut = jnp.stack([rr, gg, bb], axis=0)
    lut = lut + 0.01 * jax.random.normal(k_n, lut.shape, dtype=jnp.float32)

    ref = _ref_trilerp(lut, x)

    # Default path: bf16 MXU operands, f32 accumulation.
    lut_out, out_bf16 = trilinear_interpolation(lut, x)
    out_bf16 = jax.block_until_ready(out_bf16)
    np.testing.assert_allclose(np.asarray(out_bf16), ref, atol=2e-2)
    assert lut_out.shape == lut.shape and out_bf16.shape == x.shape

    # Reference-accuracy path: f32 operands with explicit HIGHEST precision.
    _, out_f32 = trilinear_interpolation(lut, x, use_bf16_matmul=False)
    out_f32 = jax.block_until_ready(out_f32)
    np.testing.assert_allclose(np.asarray(out_f32), ref, atol=2e-5, rtol=2e-5)

    print("KERNEL_OK")
</pallas_src>

<mosaic_0001>
module attributes {stable_mosaic.version = 11 : i64} {
  func.func @_trilerp_kernel(%arg0: i32, %arg1: i32, %arg2: memref<1x3x128xf32, #tpu.memory_space<vmem>>, %arg3: memref<27x81xbf16, #tpu.memory_space<vmem>>, %arg4: memref<1x3x128xf32, #tpu.memory_space<vmem>>) attributes {dimension_semantics = [#tpu.dimension_semantics<parallel>, #tpu.dimension_semantics<parallel>], iteration_bounds = array<i64: 2, 2>, scalar_prefetch = 0 : i64, scratch_operands = 0 : i64, tpu.core_type = #tpu.core_type<tc>, window_params = [{transform_indices = @transform_0, window_bounds = array<i64: 1, 3, 128>}, {pipeline_mode = #tpu.pipeline_mode<synchronous>, transform_indices = @transform_1, window_bounds = array<i64: 27, 81>}, {transform_indices = @transform_2, window_bounds = array<i64: 1, 3, 128>}]} {
    %c0 = arith.constant 0 : index
    %c0_0 = arith.constant 0 : index
    %c0_1 = arith.constant 0 : index
    %0 = vector.load %arg2[%c0, %c0_0, %c0_1] : memref<1x3x128xf32, #tpu.memory_space<vmem>>, vector<1x3x128xf32>
    %1 = vector.shape_cast %0 : vector<1x3x128xf32> to vector<3x128xf32>
    %2 = vector.extract_strided_slice %1 {offsets = [0, 0], sizes = [1, 128], strides = [1, 1]} : vector<3x128xf32> to vector<1x128xf32>
    %3 = vector.extract_strided_slice %1 {offsets = [1, 0], sizes = [1, 128], strides = [1, 1]} : vector<3x128xf32> to vector<1x128xf32>
    %4 = vector.extract_strided_slice %1 {offsets = [2, 0], sizes = [1, 128], strides = [1, 1]} : vector<3x128xf32> to vector<1x128xf32>
    %cst = arith.constant 7.99999189 : f32
    %5 = vector.broadcast %cst : f32 to vector<1x128xf32>
    %6 = arith.mulf %2, %5 : vector<1x128xf32>
    %cst_2 = arith.constant 7.99999189 : f32
    %7 = vector.broadcast %cst_2 : f32 to vector<1x128xf32>
    %8 = arith.mulf %3, %7 : vector<1x128xf32>
    %cst_3 = arith.constant 7.99999189 : f32
    %9 = vector.broadcast %cst_3 : f32 to vector<1x128xf32>
    %10 = arith.mulf %4, %9 : vector<1x128xf32>
    %11 = math.floor %6 : vector<1x128xf32>
    %12 = math.floor %8 : vector<1x128xf32>
    %13 = math.floor %10 : vector<1x128xf32>
    %14 = arith.subf %6, %11 : vector<1x128xf32>
    %15 = arith.subf %8, %12 : vector<1x128xf32>
    %16 = arith.subf %10, %13 : vector<1x128xf32>
    %17 = arith.fptosi %11 : vector<1x128xf32> to vector<1x128xi32>
    %18 = arith.fptosi %12 : vector<1x128xf32> to vector<1x128xi32>
    %19 = arith.fptosi %13 : vector<1x128xf32> to vector<1x128xi32>
    %20 = tpu.iota {dimensions = array<i32: 0>} : vector<9x1xi32>
    %21 = vector.broadcast %20 : vector<9x1xi32> to vector<9x128xi32>
    %22 = vector.broadcast %17 : vector<1x128xi32> to vector<9x128xi32>
    %23 = arith.subi %21, %22 : vector<9x128xi32>
    %c0_i32 = arith.constant 0 : i32
    %24 = vector.broadcast %c0_i32 : i32 to vector<9x128xi32>
    %25 = arith.cmpi eq, %23, %24 : vector<9x128xi32>
    %cst_4 = arith.constant 1.000000e+00 : f32
    %26 = vector.broadcast %cst_4 : f32 to vector<1x128xf32>
    %27 = arith.subf %26, %14 : vector<1x128xf32>
    %c1_i32 = arith.constant 1 : i32
    %28 = vector.broadcast %c1_i32 : i32 to vector<9x128xi32>
    %29 = arith.cmpi eq, %23, %28 : vector<9x128xi32>
    %cst_5 = arith.constant 0.000000e+00 : f32
    %30 = vector.shape_cast %14 : vector<1x128xf32> to vector<1x128xf32>
    %31 = vector.broadcast %30 : vector<1x128xf32> to vector<9x128xf32>
    %32 = vector.broadcast %cst_5 : f32 to vector<9x128xf32>
    %33 = arith.select %29, %31, %32 : vector<9x128xi1>, vector<9x128xf32>
    %34 = vector.shape_cast %27 : vector<1x128xf32> to vector<1x128xf32>
    %35 = vector.broadcast %34 : vector<1x128xf32> to vector<9x128xf32>
    %36 = arith.select %25, %35, %33 : vector<9x128xi1>, vector<9x128xf32>
    %37 = vector.broadcast %20 : vector<9x1xi32> to vector<9x128xi32>
    %38 = vector.broadcast %18 : vector<1x128xi32> to vector<9x128xi32>
    %39 = arith.subi %37, %38 : vector<9x128xi32>
    %c0_i32_6 = arith.constant 0 : i32
    %40 = vector.broadcast %c0_i32_6 : i32 to vector<9x128xi32>
    %41 = arith.cmpi eq, %39, %40 : vector<9x128xi32>
    %cst_7 = arith.constant 1.000000e+00 : f32
    %42 = vector.broadcast %cst_7 : f32 to vector<1x128xf32>
    %43 = arith.subf %42, %15 : vector<1x128xf32>
    %c1_i32_8 = arith.constant 1 : i32
    %44 = vector.broadcast %c1_i32_8 : i32 to vector<9x128xi32>
    %45 = arith.cmpi eq, %39, %44 : vector<9x128xi32>
    %cst_9 = arith.constant 0.000000e+00 : f32
    %46 = vector.shape_cast %15 : vector<1x128xf32> to vector<1x128xf32>
    %47 = vector.broadcast %46 : vector<1x128xf32> to vector<9x128xf32>
    %48 = vector.broadcast %cst_9 : f32 to vector<9x128xf32>
    %49 = arith.select %45, %47, %48 : vector<9x128xi1>, vector<9x128xf32>
    %50 = vector.shape_cast %43 : vector<1x128xf32> to vector<1x128xf32>
    %51 = vector.broadcast %50 : vector<1x128xf32> to vector<9x128xf32>
    %52 = arith.select %41, %51, %49 : vector<9x128xi1>, vector<9x128xf32>
    %53 = vector.broadcast %20 : vector<9x1xi32> to vector<9x128xi32>
    %54 = vector.broadcast %19 : vector<1x128xi32> to vector<9x128xi32>
    %55 = arith.subi %53, %54 : vector<9x128xi32>
    %c0_i32_10 = arith.constant 0 : i32
    %56 = vector.broadcast %c0_i32_10 : i32 to vector<9x128xi32>
    %57 = arith.cmpi eq, %55, %56 : vector<9x128xi32>
    %cst_11 = arith.constant 1.000000e+00 : f32
    %58 = vector.broadcast %cst_11 : f32 to vector<1x128xf32>
    %59 = arith.subf %58, %16 : vector<1x128xf32>
    %c1_i32_12 = arith.constant 1 : i32
    %60 = vector.broadcast %c1_i32_12 : i32 to vector<9x128xi32>
    %61 = arith.cmpi eq, %55, %60 : vector<9x128xi32>
    %cst_13 = arith.constant 0.000000e+00 : f32
    %62 = vector.shape_cast %16 : vector<1x128xf32> to vector<1x128xf32>
    %63 = vector.broadcast %62 : vector<1x128xf32> to vector<9x128xf32>
    %64 = vector.broadcast %cst_13 : f32 to vector<9x128xf32>
    %65 = arith.select %61, %63, %64 : vector<9x128xi1>, vector<9x128xf32>
    %66 = vector.shape_cast %59 : vector<1x128xf32> to vector<1x128xf32>
    %67 = vector.broadcast %66 : vector<1x128xf32> to vector<9x128xf32>
    %68 = arith.select %57, %67, %65 : vector<9x128xi1>, vector<9x128xf32>
    %69 = arith.truncf %68 : vector<9x128xf32> to vector<9x128xbf16>
    %70 = vector.shape_cast %69 : vector<9x128xbf16> to vector<9x1x128xbf16>
    %71 = arith.truncf %52 : vector<9x128xf32> to vector<9x128xbf16>
    %72 = vector.shape_cast %71 : vector<9x128xbf16> to vector<1x9x128xbf16>
    %73 = vector.broadcast %70 : vector<9x1x128xbf16> to vector<9x9x128xbf16>
    %74 = vector.broadcast %72 : vector<1x9x128xbf16> to vector<9x9x128xbf16>
    %75 = arith.mulf %73, %74 : vector<9x9x128xbf16>
    %76 = vector.shape_cast %75 : vector<9x9x128xbf16> to vector<81x128xbf16>
    %c0_14 = arith.constant 0 : index
    %c0_15 = arith.constant 0 : index
    %77 = vector.load %arg3[%c0_14, %c0_15] : memref<27x81xbf16, #tpu.memory_space<vmem>>, vector<27x81xbf16>
    %cst_16 = arith.constant dense<0.000000e+00> : vector<27x128xf32>
    %78 = tpu.matmul %77, %76, %cst_16 {dimension_numbers = #tpu.dot_dimension_numbers<[1], [0], [0], [1], [0, 0, 1, 1], [], []>} : vector<27x81xbf16>, vector<81x128xbf16>, vector<27x128xf32> -> vector<27x128xf32>
    %79 = vector.shape_cast %78 : vector<27x128xf32> to vector<3x9x128xf32>
    %80 = vector.shape_cast %36 : vector<9x128xf32> to vector<1x9x128xf32>
    %81 = vector.broadcast %80 : vector<1x9x128xf32> to vector<3x9x128xf32>
    %82 = arith.mulf %79, %81 : vector<3x9x128xf32>
    %cst_17 = arith.constant dense<0.000000e+00> : vector<3x128xf32>
    %83 = vector.multi_reduction <add>, %82, %cst_17 [1] : vector<3x9x128xf32> to vector<3x128xf32>
    %c0_18 = arith.constant 0 : index
    %c0_19 = arith.constant 0 : index
    %c0_20 = arith.constant 0 : index
    %84 = vector.load %arg4[%c0_18, %c0_19, %c0_20] : memref<1x3x128xf32, #tpu.memory_space<vmem>>, vector<1x3x128xf32>
    %85 = vector.shape_cast %84 : vector<1x3x128xf32> to vector<3x128xf32>
    %86 = vector.shape_cast %83 : vector<3x128xf32> to vector<1x3x128xf32>
    tpu.vector_store %arg4[%c0_18, %c0_19, %c0_20], %86 {strides = array<i32>} : memref<1x3x128xf32, #tpu.memory_space<vmem>>, vector<1x3x128xf32>,
    return
  }
  func.func @transform_0(%arg0: i32, %arg1: i32) -> (i32, i32, i32) {
    %c0_i32 = arith.constant 0 : i32
    %c0_i32_0 = arith.constant 0 : i32
    return %arg0, %c0_i32, %arg1 : i32, i32, i32
  }
  func.func @transform_1(%arg0: i32, %arg1: i32) -> (i32, i32) {
    %c0_i32 = arith.constant 0 : i32
    %c0_i32_0 = arith.constant 0 : i32
    %c0_i32_1 = arith.constant 0 : i32
    return %c0_i32, %c0_i32_0 : i32, i32
  }
  func.func @transform_2(%arg0: i32, %arg1: i32) -> (i32, i32, i32) {
    %c0_i32 = arith.constant 0 : i32
    %c0_i32_0 = arith.constant 0 : i32
    return %arg0, %c0_i32, %arg1 : i32, i32, i32
  }
}

</mosaic_0001>

<llo_original>
// kernel: tpu_custom_call.1
$region0: #{tpu_custom_call.1}
  #allocation0 [shape = 'u32[]', space=smem, size = 0x4, offset = 0x4, fixed_abs, tag = 'smem constant byte address 0x4 - core index']
  #allocation1 [shape = 'u32[144,128]{1,0:T(1,128)}', space=vmem, size = 0x12000, scoped, tag = 'internal scratch']
  %s0 = inlined_call_operand.vmem [shape: f32[2,3,256], index: 0, kind: input, shape index: {}]
  %s1 = inlined_call_operand.vmem [shape: bf16[27,81], index: 1, kind: input, shape index: {}]
  %s2 = inlined_call_operand.vmem [shape: f32[2,3,256], index: 2, kind: output, shape index: {}]
  %s3 = sld [smem:[#allocation0]]
  $region41: #{tpu_custom_call.1} parent=0
    _
  %s5 = ssub.s32 1, %s3
  %s6 = scalar_select 0, %s5, %s3
  loop: start=0, step=1, limit=6
  $region2: #{tpu_custom_call.1} parent=0 // loop_pre_header
    _
  $region3: #{tpu_custom_call.1} parent=0 // loop_header
    %s8 = sphi 0, %s12
    %p9 = scmp.ge.s32.totalorder %s8, 6
    %s15 = sphi 0, %s27
    %s16 = sphi 0, %s23
    %s17 = sphi 0, %s15
    %s18 = sphi 0, %s16
    %s19 = sphi 0, %s17
    %s20 = sphi 0, %s18
    %s32 = sphi 0, %s34
    %s35 = sphi 0, %s32
    %s36 = sphi 0, %s35
    %s52 = sphi 0, %s36
    %s56 = sphi 0, %s56
    %s58 = sphi 0, %s56
    %s59 = sphi 0, %s58
    %s73 = sphi 0, %s59
    %s81 = sphi 0, %s83
    %s84 = sphi 0, %s81
    %s85 = sphi 0, %s84
    %s101 = sphi 0, %s85
  $region4: #{tpu_custom_call.1} parent=0 // loop_header_branch
    %11 = sbr.rel (%p9) target = $region8
  $region5: #{tpu_custom_call.1} parent=0 // loop_body
    %s13 = ssub.s32 %s8, 1
    %s14 = ssub.s32 %s8, 2
    %s21 = sadd.s32 1, %s16
    %p22 = scmp.ge.s32.totalorder %s21, 2
    %s23 = scalar_select %p22, 0, %s21
    %s24 = sadd.s32 1, %s15
    %s25 = scalar_select %p22, %s24, %s15
    %p26 = scmp.ge.s32.totalorder %s25, 2
    %s27 = scalar_select %p26, 0, %s25
    %s28 = ssub.s32 %s15, %s27
    %s29 = ssub.s32 %s16, %s23
    %s30 = sor.u32 %s28, %s29
    %p31 = scmp.eq.s32.totalorder %s30, 0
    %s33 = sadd.s32 %s32, 1
    %s34 = scalar_select %p31, %s32, %s33
    %p37 = pneg %p31
    %p38 = scmp.eq.s32.totalorder %s8, 3
    %p39 = por %p37, %p38
    %p40 = scmp.ne.s32.totalorder %s32, %s35
    %p41 = scmp.eq.s32.totalorder %s8, 0
    %p42 = por %p40, %p41
    %p43 = scmp.ne.s32.totalorder %s32, %s35
    %p44 = scmp.eq.s32.totalorder %s13, 3
    %p45 = por %p43, %p44
    %p46 = scmp.ne.s32.totalorder %s35, %s36
    %p47 = scmp.eq.s32.totalorder %s13, 0
    %p48 = por %p46, %p47
    %p49 = scmp.ne.s32.totalorder %s35, %s36
    %p50 = scmp.eq.s32.totalorder %s14, 3
    %p51 = por %p49, %p50
    %p53 = scmp.ne.s32.totalorder %s36, %s52
    %p54 = scmp.eq.s32.totalorder %s14, 0
    %p55 = por %p53, %p54
    %s57 = sadd.s32 %s56, 1
    %p60 = scmp.eq.s32.totalorder %s8, 3
    %p61 = scmp.ne.s32.totalorder %s56, %s58
    %p62 = scmp.eq.s32.totalorder %s8, 0
    %p63 = por %p61, %p62
    %p64 = scmp.ne.s32.totalorder %s56, %s58
    %p65 = scmp.eq.s32.totalorder %s13, 3
    %p66 = por %p64, %p65
    %p67 = scmp.ne.s32.totalorder %s58, %s59
    %p68 = scmp.eq.s32.totalorder %s13, 0
    %p69 = por %p67, %p68
    %p70 = scmp.ne.s32.totalorder %s58, %s59
    %p71 = scmp.eq.s32.totalorder %s14, 3
    %p72 = por %p70, %p71
    %p74 = scmp.ne.s32.totalorder %s59, %s73
    %p75 = scmp.eq.s32.totalorder %s14, 0
    %p76 = por %p74, %p75
    %s77 = ssub.s32 %s15, %s27
    %s78 = ssub.s32 %s16, %s23
    %s79 = sor.u32 %s77, %s78
    %p80 = scmp.eq.s32.totalorder %s79, 0
    %s82 = sadd.s32 %s81, 1
    %s83 = scalar_select %p80, %s81, %s82
    %p86 = pneg %p80
    %p87 = scmp.eq.s32.totalorder %s8, 3
    %p88 = por %p86, %p87
    %p89 = scmp.ne.s32.totalorder %s81, %s84
    %p90 = scmp.eq.s32.totalorder %s8, 0
    %p91 = por %p89, %p90
    %p92 = scmp.ne.s32.totalorder %s81, %s84
    %p93 = scmp.eq.s32.totalorder %s13, 3
    %p94 = por %p92, %p93
    %p95 = scmp.ne.s32.totalorder %s84, %s85
    %p96 = scmp.eq.s32.totalorder %s13, 0
    %p97 = por %p95, %p96
    %p98 = scmp.ne.s32.totalorder %s84, %s85
    %p99 = scmp.eq.s32.totalorder %s14, 3
    %p100 = por %p98, %p99
    %p102 = scmp.ne.s32.totalorder %s85, %s101
    %p103 = scmp.eq.s32.totalorder %s14, 0
    %p104 = por %p102, %p103
    %p105 = scmp.le.s32.totalorder 1, %s8
    %p106 = scmp.lt.s32.totalorder %s8, 5
    %p107 = pnand %p105, %p106
    %p108 = pneg %p107
    // Predicated region
    $region9: #{tpu_custom_call.1} parent=5 // pred_check
      _
    $region10: #{tpu_custom_call.1} parent=5 // pred_check_branch
      %110 = sbr.rel (%p107) target = $region12
    $region11: #{tpu_custom_call.1} parent=5 // pred_region
      %s111 = ssub.s32 %s8, 1
      // Predicated region
      $region13: #{tpu_custom_call.1} parent=11 // pred_check
        %p112 = pneg %p69
      $region14: #{tpu_custom_call.1} parent=11 // pred_check_branch
        %114 = sbr.rel (%p112) target = $region16
      $region15: #{tpu_custom_call.1} parent=11 // pred_region
        _
      $region16: #{tpu_custom_call.1} parent=11 // pred_fallthru
        _
    $region12: #{tpu_custom_call.1} parent=5 // pred_fallthru
      _
    %p115 = scmp.lt.s32.totalorder %s8, 4
    // Predicated region
    $region17: #{tpu_custom_call.1} parent=5 // pred_check
      %p116 = pneg %p115
    $region18: #{tpu_custom_call.1} parent=5 // pred_check_branch
      %118 = sbr.rel (%p116) target = $region20
    $region19: #{tpu_custom_call.1} parent=5 // pred_region
      // Predicated region
      $region21: #{tpu_custom_call.1} parent=19 // pred_check
        %p119 = pneg %p42
      $region22: #{tpu_custom_call.1} parent=19 // pred_check_branch
        %121 = sbr.rel (%p119) target = $region24
      $region23: #{tpu_custom_call.1} parent=19 // pred_region
        %p122 = scmp.lt.s32.totalorder %s15, 1
        %s123 = scalar_select %p122, %s15, 1
        %p124 = scmp.lt.s32.totalorder %s16, 1
        %s125 = scalar_select %p124, %s16, 1
        %s126 = smul.addr %s123, 2
        %s127 = sadd.s32 %s125, %s126
        %s128 = smul.addr %s127, 4
        %s129 = scalar_lea.vmem %s0, %s128
      $region24: #{tpu_custom_call.1} parent=19 // pred_fallthru
        _
    $region20: #{tpu_custom_call.1} parent=5 // pred_fallthru
      _
    %p130 = scmp.le.s32.totalorder 1, %s8
    %p131 = scmp.lt.s32.totalorder %s8, 5
    %p132 = pnand %p130, %p131
    %p133 = pneg %p132
    // Predicated region
    $region25: #{tpu_custom_call.1} parent=5 // pred_check
      _
    $region26: #{tpu_custom_call.1} parent=5 // pred_check_branch
      %135 = sbr.rel (%p132) target = $region28
    $region27: #{tpu_custom_call.1} parent=5 // pred_region
      %s136 = ssub.s32 %s8, 1
      %p137 = scmp.lt.s32.totalorder %s17, 1
      %s138 = scalar_select %p137, %s17, 1
      %p139 = scmp.lt.s32.totalorder %s18, 1
      %s140 = scalar_select %p139, %s18, 1
      %s141 = smul.addr %s138, 2
      %s142 = sadd.s32 %s140, %s141
      %s143 = smul.addr %s142, 4
      %s144 = scalar_lea.vmem %s0, %s143
      %p145 = pneg %p48
      %p146 = pneg %p45
      %p147 = pneg %p69
      %p148 = pneg %p66
      %p149 = pneg %p97
      %p150 = pneg %p94
      %p151 = scmp.lt.s32.totalorder %s17, 1
      %s152 = scalar_select %p151, %s17, 1
      %p153 = scmp.lt.s32.totalorder %s18, 1
      %s154 = scalar_select %p153, %s18, 1
      %s155 = smul.addr %s152, 2
      %s156 = sadd.s32 %s154, %s155
      %s157 = smul.addr %s156, 4
      %s158 = scalar_lea.vmem %s2, %s157
      %p159 = scmp.lt.s32.totalorder %s17, 1
      %s160 = scalar_select %p159, %s17, 1
      %p161 = scmp.lt.s32.totalorder %s18, 1
      %s162 = scalar_select %p161, %s18, 1
      %s163 = smul.addr %s160, 2
      %s164 = sadd.s32 %s162, %s163
      %s165 = smul.addr %s164, 4
      %s166 = scalar_lea.vmem %s0, %s165
      %p167 = scmp.lt.s32.totalorder %s17, 1
      %s168 = scalar_select %p167, %s17, 1
      %p169 = scmp.lt.s32.totalorder %s18, 1
      %s170 = scalar_select %p169, %s18, 1
      %s171 = smul.addr %s168, 2
      %s172 = sadd.s32 %s170, %s171
      %s173 = smul.addr %s172, 4
      %s174 = scalar_lea.vmem %s2, %s173
      %v176 = vld [vmem:[%s166] sm:$0x7]
      %v177 = vmul.f32 %v176, 7.999992
      %v178 = vfloor.f32 %v177
      %v179 = vsub.f32 %v177, %v178
      %v180 = vcvt.f32.s32.to.zero.pseudo %v178
      %v181 = vlaneseq
      %v182 = vshrl.u32 %v181, 7
      %v183 = vadd.s32 %v182, 8
      %v184 = vlaneseq
      %v185 = vshrl.u32 %v184, 7
      %v186 = vsub.s32 0, %v185
      %v187 = vrot.slane %v180, %v186
      %v188 = vsub.s32 %v182, %v187
      %v189 = vsub.s32 %v183, %v187
      %vm190 = vcmp.eq.s32.totalorder %v188, 0
      %vm191 = vcmp.eq.s32.totalorder %v189, 0
      %v192 = vsub.f32 1.0, %v179
      %vm193 = vcmp.eq.s32.totalorder %v188, 1
      %vm194 = vcmp.eq.s32.totalorder %v189, 1
      %v195 = vlaneseq
      %v196 = vshrl.u32 %v195, 7
      %v197 = vsub.s32 0, %v196
      %v198 = vrot.slane %v179, %v197
      %v199 = vsel %vm193, %v198, 0.0
      %v200 = vsel %vm194, %v198, 0.0
      %v201 = vlaneseq
      %v202 = vshrl.u32 %v201, 7
      %v203 = vsub.s32 0, %v202
      %v204 = vrot.slane %v192, %v203
      %v205 = vsel %vm190, %v204, %v199
      %v206 = vsel %vm191, %v204, %v200
      %v207 = vlaneseq
      %v208 = vshrl.u32 %v207, 7
      %v209 = vsub.s32 1, %v208
      %v210 = vrot.slane %v180, %v209
      %v211 = vsub.s32 %v182, %v210
      %v212 = vsub.s32 %v183, %v210
      %vm213 = vcmp.eq.s32.totalorder %v211, 0
      %vm214 = vcmp.eq.s32.totalorder %v212, 0
      %vm215 = vcmp.eq.s32.totalorder %v211, 1
      %vm216 = vcmp.eq.s32.totalorder %v212, 1
      %v217 = vlaneseq
      %v218 = vshrl.u32 %v217, 7
      %v219 = vsub.s32 1, %v218
      %v220 = vrot.slane %v179, %v219
      %v221 = vsel %vm215, %v220, 0.0
      %v222 = vsel %vm216, %v220, 0.0
      %v223 = vlaneseq
      %v224 = vshrl.u32 %v223, 7
      %v225 = vsub.s32 1, %v224
      %v226 = vrot.slane %v192, %v225
      %v227 = vsel %vm213, %v226, %v221
      %v228 = vsel %vm214, %v226, %v222
      %v229 = vlaneseq
      %v230 = vshrl.u32 %v229, 7
      %v231 = vsub.s32 2, %v230
      %v232 = vrot.slane %v180, %v231
      %v233 = vsub.s32 %v182, %v232
      %v234 = vsub.s32 %v183, %v232
      %vm235 = vcmp.eq.s32.totalorder %v233, 0
      %vm236 = vcmp.eq.s32.totalorder %v234, 0
      %vm237 = vcmp.eq.s32.totalorder %v233, 1
      %vm238 = vcmp.eq.s32.totalorder %v234, 1
      %v239 = vlaneseq
      %v240 = vshrl.u32 %v239, 7
      %v241 = vsub.s32 2, %v240
      %v242 = vrot.slane %v179, %v241
      %v243 = vsel %vm237, %v242, 0.0
      %v244 = vsel %vm238, %v242, 0.0
      %v245 = vlaneseq
      %v246 = vshrl.u32 %v245, 7
      %v247 = vsub.s32 2, %v246
      %v248 = vrot.slane %v192, %v247
      %v249 = vsel %vm235, %v248, %v243
      %v250 = vsel %vm236, %v248, %v244
      %v251 = vpack.c.bf16 %v250, %v249
      %v253 = vcombine.high %v251, %v251
      %v255 = vunpack.c.l.s4 1966171168
      %v256 = vunpack.c.0.s8 %v255
      %v257 = vlaneseq
      %v258 = vshrl.u32 %v257, 7
      %v259 = vsub.s32 %v256, %v258
      %v260 = vrot.slane %v251, %v259
      %v262 = vunpack.c.l.s4 1966171168
      %v263 = vunpack.c.0.s8 %v262
      %v264 = vlaneseq
      %v265 = vshrl.u32 %v264, 7
      %v266 = vsub.s32 %v263, %v265
      %v267 = vrot.slane %v253, %v266
      %v268 = vcombine.high %v260, %v260
      %v270 = vunpack.c.l.s4 1966171168
      %v271 = vunpack.c.0.s8 %v270
      %v272 = vlaneseq
      %v273 = vshrl.u32 %v272, 7
      %v274 = vsub.s32 %v271, %v273
      %v275 = vrot.slane %v260, %v274
      %v277 = vunpack.c.l.s4 1966171168
      %v278 = vunpack.c.0.s8 %v277
      %v279 = vlaneseq
      %v280 = vshrl.u32 %v279, 7
      %v281 = vsub.s32 %v278, %v280
      %v282 = vrot.slane %v267, %v281
      %v284 = vunpack.c.l.s4 1966171168
      %v285 = vunpack.c.0.s8 %v284
      %v286 = vlaneseq
      %v287 = vshrl.u32 %v286, 7
      %v288 = vsub.s32 %v285, %v287
      %v289 = vrot.slane %v268, %v288
      %v290 = vcombine.high %v275, %v275
      %v291 = vcombine.high %v289, %v289
      %v292 = vunpack.i.l.s16 %v275
      %v293 = vunpack.i.h.s16 %v275
      %v294 = vunpack.i.l.s16 %v289
      %v295 = vunpack.i.h.s16 %v289
      %v296 = vunpack.i.l.s16 %v290
      %v297 = vunpack.i.h.s16 %v290
      %v298 = vunpack.i.l.s16 %v291
      %v299 = vunpack.i.h.s16 %v291
      %v300 = vunpack.i.l.s16 %v282
      %v301 = vpack.c.bf16 %v228, %v227
      %v302 = vpack.i.b16 %v292, %v292
      %v303 = vpack.i.b16 %v293, %v293
      %v304 = vpack.i.b16 %v294, %v294
      %v305 = vpack.i.b16 %v295, %v295
      %v306 = vpack.i.b16 %v296, %v296
      %v307 = vpack.i.b16 %v297, %v297
      %v308 = vpack.i.b16 %v298, %v298
      %v309 = vpack.i.b16 %v299, %v299
      %v310 = vpack.i.b16 %v300, %v300
      %v311 = vlaneseq
      %v312 = vshrl.u32 %v311, 7
      %v313 = vsub.s32 0, %v312
      %v314 = vrot.slane %v302, %v313
      %v315 = vlaneseq
      %v316 = vshrl.u32 %v315, 7
      %v317 = vsub.s32 0, %v316
      %v318 = vrot.slane %v303, %v317
      %v319 = vlaneseq
      %v320 = vshrl.u32 %v319, 7
      %v321 = vsub.s32 0, %v320
      %v322 = vrot.slane %v304, %v321
      %v323 = vlaneseq
      %v324 = vshrl.u32 %v323, 7
      %v325 = vsub.s32 0, %v324
      %v326 = vrot.slane %v305, %v325
      %v327 = vlaneseq
      %v328 = vshrl.u32 %v327, 7
      %v329 = vsub.s32 0, %v328
      %v330 = vrot.slane %v306, %v329
      %v331 = vlaneseq
      %v332 = vshrl.u32 %v331, 7
      %v333 = vsub.s32 0, %v332
      %v334 = vrot.slane %v307, %v333
      %v335 = vlaneseq
      %v336 = vshrl.u32 %v335, 7
      %v337 = vsub.s32 0, %v336
      %v338 = vrot.slane %v308, %v337
      %v339 = vlaneseq
      %v340 = vshrl.u32 %v339, 7
      %v341 = vsub.s32 0, %v340
      %v342 = vrot.slane %v309, %v341
      %v343 = vlaneseq
      %v344 = vshrl.u32 %v343, 7
      %v345 = vsub.s32 0, %v344
      %v346 = vrot.slane %v310, %v345
      %v348 = vpack.i.b16 %v314, %v314
      %v350 = vlaneseq
      %v351 = vshrl.u32 %v350, 7
      %v352 = vsub.s32 0, %v351
      %v353 = vrot.slane %v348, %v352
      %v355 = vpack.i.b16 %v318, %v318
      %v357 = vlaneseq
      %v358 = vshrl.u32 %v357, 7
      %v359 = vsub.s32 0, %v358
      %v360 = vrot.slane %v355, %v359
      %v362 = vpack.i.b16 %v322, %v322
      %v364 = vlaneseq
      %v365 = vshrl.u32 %v364, 7
      %v366 = vsub.s32 0, %v365
      %v367 = vrot.slane %v362, %v366
      %v369 = vpack.i.b16 %v326, %v326
      %v371 = vlaneseq
      %v372 = vshrl.u32 %v371, 7
      %v373 = vsub.s32 0, %v372
      %v374 = vrot.slane %v369, %v373
      %v376 = vpack.i.b16 %v330, %v330
      %v378 = vlaneseq
      %v379 = vshrl.u32 %v378, 7
      %v380 = vsub.s32 0, %v379
      %v381 = vrot.slane %v376, %v380
      %v383 = vpack.i.b16 %v334, %v334
      %v385 = vlaneseq
      %v386 = vshrl.u32 %v385, 7
      %v387 = vsub.s32 0, %v386
      %v388 = vrot.slane %v383, %v387
      %v390 = vpack.i.b16 %v338, %v338
      %v392 = vlaneseq
      %v393 = vshrl.u32 %v392, 7
      %v394 = vsub.s32 0, %v393
      %v395 = vrot.slane %v390, %v394
      %v397 = vpack.i.b16 %v342, %v342
      %v399 = vlaneseq
      %v400 = vshrl.u32 %v399, 7
      %v401 = vsub.s32 0, %v400
      %v402 = vrot.slane %v397, %v401
      %v404 = vpack.i.b16 %v346, %v346
      %v406 = vlaneseq
      %v407 = vshrl.u32 %v406, 7
      %v408 = vsub.s32 0, %v407
      %v409 = vrot.slane %v404, %v408
      %v410 = vmul.bf16 %v353, %v301
      %v411 = vmul.bf16 %v360, %v301
      %v412 = vmul.bf16 %v367, %v301
      %v413 = vmul.bf16 %v374, %v301
      %v414 = vmul.bf16 %v381, %v301
      %v415 = vmul.bf16 %v388, %v301
      %v416 = vmul.bf16 %v395, %v301
      %v417 = vmul.bf16 %v402, %v301
      %v418 = vmul.bf16 %v409, %v301
      %v428 = vcombine.high %v410, %v410
      %v430 = vunpack.c.l.s4 1966171168
      %v431 = vunpack.c.0.s8 %v430
      %v432 = vlaneseq
      %v433 = vshrl.u32 %v432, 7
      %v434 = vsub.s32 %v431, %v433
      %v435 = vrot.slane %v410, %v434
      %v437 = vunpack.c.l.s4 1966171168
      %v438 = vunpack.c.0.s8 %v437
      %v439 = vlaneseq
      %v440 = vshrl.u32 %v439, 7
      %v441 = vsub.s32 %v438, %v440
      %v442 = vrot.slane %v428, %v441
      %v443 = vcombine.high %v435, %v435
      %v445 = vunpack.c.l.s4 1966171168
      %v446 = vunpack.c.0.s8 %v445
      %v447 = vlaneseq
      %v448 = vshrl.u32 %v447, 7
      %v449 = vsub.s32 %v446, %v448
      %v450 = vrot.slane %v435, %v449
      %v452 = vunpack.c.l.s4 1966171168
      %v453 = vunpack.c.0.s8 %v452
      %v454 = vlaneseq
      %v455 = vshrl.u32 %v454, 7
      %v456 = vsub.s32 %v453, %v455
      %v457 = vrot.slane %v442, %v456
      %v459 = vunpack.c.l.s4 1966171168
      %v460 = vunpack.c.0.s8 %v459
      %v461 = vlaneseq
      %v462 = vshrl.u32 %v461, 7
      %v463 = vsub.s32 %v460, %v462
      %v464 = vrot.slane %v443, %v463
      %v465 = vcombine.high %v450, %v450
      %v466 = vcombine.high %v464, %v464
      %v467 = vcombine.high %v411, %v411
      %v469 = vunpack.c.l.s4 1966171168
      %v470 = vunpack.c.0.s8 %v469
      %v471 = vlaneseq
      %v472 = vshrl.u32 %v471, 7
      %v473 = vsub.s32 %v470, %v472
      %v474 = vrot.slane %v411, %v473
      %v476 = vunpack.c.l.s4 1966171168
      %v477 = vunpack.c.0.s8 %v476
      %v478 = vlaneseq
      %v479 = vshrl.u32 %v478, 7
      %v480 = vsub.s32 %v477, %v479
      %v481 = vrot.slane %v467, %v480
      %v482 = vcombine.high %v474, %v474
      %v484 = vunpack.c.l.s4 1966171168
      %v485 = vunpack.c.0.s8 %v484
      %v486 = vlaneseq
      %v487 = vshrl.u32 %v486, 7
      %v488 = vsub.s32 %v485, %v487
      %v489 = vrot.slane %v474, %v488
      %v491 = vunpack.c.l.s4 1966171168
      %v492 = vunpack.c.0.s8 %v491
      %v493 = vlaneseq
      %v494 = vshrl.u32 %v493, 7
      %v495 = vsub.s32 %v492, %v494
      %v496 = vrot.slane %v481, %v495
      %v498 = vunpack.c.l.s4 1966171168
      %v499 = vunpack.c.0.s8 %v498
      %v500 = vlaneseq
      %v501 = vshrl.u32 %v500, 7
      %v502 = vsub.s32 %v499, %v501
      %v503 = vrot.slane %v482, %v502
      %v504 = vcombine.high %v489, %v489
      %v505 = vcombine.high %v503, %v503
      %v506 = vcombine.high %v412, %v412
      %v508 = vunpack.c.l.s4 1966171168
      %v509 = vunpack.c.0.s8 %v508
      %v510 = vlaneseq
      %v511 = vshrl.u32 %v510, 7
      %v512 = vsub.s32 %v509, %v511
      %v513 = vrot.slane %v412, %v512
      %v515 = vunpack.c.l.s4 1966171168
      %v516 = vunpack.c.0.s8 %v515
      %v517 = vlaneseq
      %v518 = vshrl.u32 %v517, 7
      %v519 = vsub.s32 %v516, %v518
      %v520 = vrot.slane %v506, %v519
      %v521 = vcombine.high %v513, %v513
      %v523 = vunpack.c.l.s4 1966171168
      %v524 = vunpack.c.0.s8 %v523
      %v525 = vlaneseq
      %v526 = vshrl.u32 %v525, 7
      %v527 = vsub.s32 %v524, %v526
      %v528 = vrot.slane %v513, %v527
      %v530 = vunpack.c.l.s4 1966171168
      %v531 = vunpack.c.0.s8 %v530
      %v532 = vlaneseq
      %v533 = vshrl.u32 %v532, 7
      %v534 = vsub.s32 %v531, %v533
      %v535 = vrot.slane %v520, %v534
      %v537 = vunpack.c.l.s4 1966171168
      %v538 = vunpack.c.0.s8 %v537
      %v539 = vlaneseq
      %v540 = vshrl.u32 %v539, 7
      %v541 = vsub.s32 %v538, %v540
      %v542 = vrot.slane %v521, %v541
      %v543 = vcombine.high %v528, %v528
      %v544 = vcombine.high %v542, %v542
      %v545 = vcombine.high %v413, %v413
      %v547 = vunpack.c.l.s4 1966171168
      %v548 = vunpack.c.0.s8 %v547
      %v549 = vlaneseq
      %v550 = vshrl.u32 %v549, 7
      %v551 = vsub.s32 %v548, %v550
      %v552 = vrot.slane %v413, %v551
      %v554 = vunpack.c.l.s4 1966171168
      %v555 = vunpack.c.0.s8 %v554
      %v556 = vlaneseq
      %v557 = vshrl.u32 %v556, 7
      %v558 = vsub.s32 %v555, %v557
      %v559 = vrot.slane %v545, %v558
      %v560 = vcombine.high %v552, %v552
      %v562 = vunpack.c.l.s4 1966171168
      %v563 = vunpack.c.0.s8 %v562
      %v564 = vlaneseq
      %v565 = vshrl.u32 %v564, 7
      %v566 = vsub.s32 %v563, %v565
      %v567 = vrot.slane %v552, %v566
      %v569 = vunpack.c.l.s4 1966171168
      %v570 = vunpack.c.0.s8 %v569
      %v571 = vlaneseq
      %v572 = vshrl.u32 %v571, 7
      %v573 = vsub.s32 %v570, %v572
      %v574 = vrot.slane %v559, %v573
      %v576 = vunpack.c.l.s4 1966171168
      %v577 = vunpack.c.0.s8 %v576
      %v578 = vlaneseq
      %v579 = vshrl.u32 %v578, 7
      %v580 = vsub.s32 %v577, %v579
      %v581 = vrot.slane %v560, %v580
      %v582 = vcombine.high %v567, %v567
      %v583 = vcombine.high %v581, %v581
      %v584 = vcombine.high %v414, %v414
      %v586 = vunpack.c.l.s4 1966171168
      %v587 = vunpack.c.0.s8 %v586
      %v588 = vlaneseq
      %v589 = vshrl.u32 %v588, 7
      %v590 = vsub.s32 %v587, %v589
      %v591 = vrot.slane %v414, %v590
      %v593 = vunpack.c.l.s4 1966171168
      %v594 = vunpack.c.0.s8 %v593
      %v595 = vlaneseq
      %v596 = vshrl.u32 %v595, 7
      %v597 = vsub.s32 %v594, %v596
      %v598 = vrot.slane %v584, %v597
      %v599 = vcombine.high %v591, %v591
      %v601 = vunpack.c.l.s4 1966171168
      %v602 = vunpack.c.0.s8 %v601
      %v603 = vlaneseq
      %v604 = vshrl.u32 %v603, 7
      %v605 = vsub.s32 %v602, %v604
      %v606 = vrot.slane %v591, %v605
      %v608 = vunpack.c.l.s4 1966171168
      %v609 = vunpack.c.0.s8 %v608
      %v610 = vlaneseq
      %v611 = vshrl.u32 %v610, 7
      %v612 = vsub.s32 %v609, %v611
      %v613 = vrot.slane %v598, %v612
      %v615 = vunpack.c.l.s4 1966171168
      %v616 = vunpack.c.0.s8 %v615
      %v617 = vlaneseq
      %v618 = vshrl.u32 %v617, 7
      %v619 = vsub.s32 %v616, %v618
      %v620 = vrot.slane %v599, %v619
      %v621 = vcombine.high %v606, %v606
      %v622 = vcombine.high %v620, %v620
      %v623 = vcombine.high %v415, %v415
      %v625 = vunpack.c.l.s4 1966171168
      %v626 = vunpack.c.0.s8 %v625
      %v627 = vlaneseq
      %v628 = vshrl.u32 %v627, 7
      %v629 = vsub.s32 %v626, %v628
      %v630 = vrot.slane %v415, %v629
      %v632 = vunpack.c.l.s4 1966171168
      %v633 = vunpack.c.0.s8 %v632
      %v634 = vlaneseq
      %v635 = vshrl.u32 %v634, 7
      %v636 = vsub.s32 %v633, %v635
      %v637 = vrot.slane %v623, %v636
      %v638 = vcombine.high %v630, %v630
      %v640 = vunpack.c.l.s4 1966171168
      %v641 = vunpack.c.0.s8 %v640
      %v642 = vlaneseq
      %v643 = vshrl.u32 %v642, 7
      %v644 = vsub.s32 %v641, %v643
      %v645 = vrot.slane %v630, %v644
      %v647 = vunpack.c.l.s4 1966171168
      %v648 = vunpack.c.0.s8 %v647
      %v649 = vlaneseq
      %v650 = vshrl.u32 %v649, 7
      %v651 = vsub.s32 %v648, %v650
      %v652 = vrot.slane %v637, %v651
      %v654 = vunpack.c.l.s4 1966171168
      %v655 = vunpack.c.0.s8 %v654
      %v656 = vlaneseq
      %v657 = vshrl.u32 %v656, 7
      %v658 = vsub.s32 %v655, %v657
      %v659 = vrot.slane %v638, %v658
      %v660 = vcombine.high %v645, %v645
      %v661 = vcombine.high %v659, %v659
      %v662 = vcombine.high %v416, %v416
      %v664 = vunpack.c.l.s4 1966171168
      %v665 = vunpack.c.0.s8 %v664
      %v666 = vlaneseq
      %v667 = vshrl.u32 %v666, 7
      %v668 = vsub.s32 %v665, %v667
      %v669 = vrot.slane %v416, %v668
      %v671 = vunpack.c.l.s4 1966171168
      %v672 = vunpack.c.0.s8 %v671
      %v673 = vlaneseq
      %v674 = vshrl.u32 %v673, 7
      %v675 = vsub.s32 %v672, %v674
      %v676 = vrot.slane %v662, %v675
      %v677 = vcombine.high %v669, %v669
      %v679 = vunpack.c.l.s4 1966171168
      %v680 = vunpack.c.0.s8 %v679
      %v681 = vlaneseq
      %v682 = vshrl.u32 %v681, 7
      %v683 = vsub.s32 %v680, %v682
      %v684 = vrot.slane %v669, %v683
      %v686 = vunpack.c.l.s4 1966171168
      %v687 = vunpack.c.0.s8 %v686
      %v688 = vlaneseq
      %v689 = vshrl.u32 %v688, 7
      %v690 = vsub.s32 %v687, %v689
      %v691 = vrot.slane %v676, %v690
      %v693 = vunpack.c.l.s4 1966171168
      %v694 = vunpack.c.0.s8 %v693
      %v695 = vlaneseq
      %v696 = vshrl.u32 %v695, 7
      %v697 = vsub.s32 %v694, %v696
      %v698 = vrot.slane %v677, %v697
      %v699 = vcombine.high %v684, %v684
      %v700 = vcombine.high %v698, %v698
      %v701 = vcombine.high %v417, %v417
      %v703 = vunpack.c.l.s4 1966171168
      %v704 = vunpack.c.0.s8 %v703
      %v705 = vlaneseq
      %v706 = vshrl.u32 %v705, 7
      %v707 = vsub.s32 %v704, %v706
      %v708 = vrot.slane %v417, %v707
      %v710 = vunpack.c.l.s4 1966171168
      %v711 = vunpack.c.0.s8 %v710
      %v712 = vlaneseq
      %v713 = vshrl.u32 %v712, 7
      %v714 = vsub.s32 %v711, %v713
      %v715 = vrot.slane %v701, %v714
      %v716 = vcombine.high %v708, %v708
      %v718 = vunpack.c.l.s4 1966171168
      %v719 = vunpack.c.0.s8 %v718
      %v720 = vlaneseq
      %v721 = vshrl.u32 %v720, 7
      %v722 = vsub.s32 %v719, %v721
      %v723 = vrot.slane %v708, %v722
      %v725 = vunpack.c.l.s4 1966171168
      %v726 = vunpack.c.0.s8 %v725
      %v727 = vlaneseq
      %v728 = vshrl.u32 %v727, 7
      %v729 = vsub.s32 %v726, %v728
      %v730 = vrot.slane %v715, %v729
      %v732 = vunpack.c.l.s4 1966171168
      %v733 = vunpack.c.0.s8 %v732
      %v734 = vlaneseq
      %v735 = vshrl.u32 %v734, 7
      %v736 = vsub.s32 %v733, %v735
      %v737 = vrot.slane %v716, %v736
      %v738 = vcombine.high %v723, %v723
      %v739 = vcombine.high %v737, %v737
      %v740 = vcombine.high %v418, %v418
      %v742 = vunpack.c.l.s4 1966171168
      %v743 = vunpack.c.0.s8 %v742
      %v744 = vlaneseq
      %v745 = vshrl.u32 %v744, 7
      %v746 = vsub.s32 %v743, %v745
      %v747 = vrot.slane %v418, %v746
      %v749 = vunpack.c.l.s4 1966171168
      %v750 = vunpack.c.0.s8 %v749
      %v751 = vlaneseq
      %v752 = vshrl.u32 %v751, 7
      %v753 = vsub.s32 %v750, %v752
      %v754 = vrot.slane %v740, %v753
      %v755 = vcombine.high %v747, %v747
      %v757 = vunpack.c.l.s4 1966171168
      %v758 = vunpack.c.0.s8 %v757
      %v759 = vlaneseq
      %v760 = vshrl.u32 %v759, 7
      %v761 = vsub.s32 %v758, %v760
      %v762 = vrot.slane %v747, %v761
      %v764 = vunpack.c.l.s4 1966171168
      %v765 = vunpack.c.0.s8 %v764
      %v766 = vlaneseq
      %v767 = vshrl.u32 %v766, 7
      %v768 = vsub.s32 %v765, %v767
      %v769 = vrot.slane %v754, %v768
      %v771 = vunpack.c.l.s4 1966171168
      %v772 = vunpack.c.0.s8 %v771
      %v773 = vlaneseq
      %v774 = vshrl.u32 %v773, 7
      %v775 = vsub.s32 %v772, %v774
      %v776 = vrot.slane %v755, %v775
      %v777 = vcombine.high %v762, %v762
      %v778 = vcombine.high %v776, %v776
      %v779 = vunpack.i.l.s16 %v450
      %v780 = vunpack.i.h.s16 %v450
      %v781 = vunpack.i.l.s16 %v464
      %v782 = vunpack.i.h.s16 %v464
      %v783 = vunpack.i.l.s16 %v465
      %v784 = vunpack.i.h.s16 %v465
      %v785 = vunpack.i.l.s16 %v466
      %v786 = vunpack.i.h.s16 %v466
      %v787 = vunpack.i.l.s16 %v457
      %v788 = vunpack.i.l.s16 %v489
      %v789 = vunpack.i.h.s16 %v489
      %v790 = vunpack.i.l.s16 %v503
      %v791 = vunpack.i.h.s16 %v503
      %v792 = vunpack.i.l.s16 %v504
      %v793 = vunpack.i.h.s16 %v504
      %v794 = vunpack.i.l.s16 %v505
      %v795 = vunpack.i.h.s16 %v505
      %v796 = vunpack.i.l.s16 %v496
      %v797 = vunpack.i.l.s16 %v528
      %v798 = vunpack.i.h.s16 %v528
      %v799 = vunpack.i.l.s16 %v542
      %v800 = vunpack.i.h.s16 %v542
      %v801 = vunpack.i.l.s16 %v543
      %v802 = vunpack.i.h.s16 %v543
      %v803 = vunpack.i.l.s16 %v544
      %v804 = vunpack.i.h.s16 %v544
      %v805 = vunpack.i.l.s16 %v535
      %v806 = vunpack.i.l.s16 %v567
      %v807 = vunpack.i.h.s16 %v567
      %v808 = vunpack.i.l.s16 %v581
      %v809 = vunpack.i.h.s16 %v581
      %v810 = vunpack.i.l.s16 %v582
      %v811 = vunpack.i.h.s16 %v582
      %v812 = vunpack.i.l.s16 %v583
      %v813 = vunpack.i.h.s16 %v583
      %v814 = vunpack.i.l.s16 %v574
      %v815 = vunpack.i.l.s16 %v606
      %v816 = vunpack.i.h.s16 %v606
      %v817 = vunpack.i.l.s16 %v620
      %v818 = vunpack.i.h.s16 %v620
      %v819 = vunpack.i.l.s16 %v621
      %v820 = vunpack.i.h.s16 %v621
      %v821 = vunpack.i.l.s16 %v622
      %v822 = vunpack.i.h.s16 %v622
      %v823 = vunpack.i.l.s16 %v613
      %v824 = vunpack.i.l.s16 %v645
      %v825 = vunpack.i.h.s16 %v645
      %v826 = vunpack.i.l.s16 %v659
      %v827 = vunpack.i.h.s16 %v659
      %v828 = vunpack.i.l.s16 %v660
      %v829 = vunpack.i.h.s16 %v660
      %v830 = vunpack.i.l.s16 %v661
      %v831 = vunpack.i.h.s16 %v661
      %v832 = vunpack.i.l.s16 %v652
      %v833 = vunpack.i.l.s16 %v684
      %v834 = vunpack.i.h.s16 %v684
      %v835 = vunpack.i.l.s16 %v698
      %v836 = vunpack.i.h.s16 %v698
      %v837 = vunpack.i.l.s16 %v699
      %v838 = vunpack.i.h.s16 %v699
      %v839 = vunpack.i.l.s16 %v700
      %v840 = vunpack.i.h.s16 %v700
      %v841 = vunpack.i.l.s16 %v691
      %v842 = vunpack.i.l.s16 %v723
      %v843 = vunpack.i.h.s16 %v723
      %v844 = vunpack.i.l.s16 %v737
      %v845 = vunpack.i.h.s16 %v737
      %v846 = vunpack.i.l.s16 %v738
      %v847 = vunpack.i.h.s16 %v738
      %v848 = vunpack.i.l.s16 %v739
      %v849 = vunpack.i.h.s16 %v739
      %v850 = vunpack.i.l.s16 %v730
      %v851 = vunpack.i.l.s16 %v762
      %v852 = vunpack.i.h.s16 %v762
      %v853 = vunpack.i.l.s16 %v776
      %v854 = vunpack.i.h.s16 %v776
      %v855 = vunpack.i.l.s16 %v777
      %v856 = vunpack.i.h.s16 %v777
      %v857 = vunpack.i.l.s16 %v778
      %v858 = vunpack.i.h.s16 %v778
      %v859 = vunpack.i.l.s16 %v769
      %v860 = vld [vmem:[%s1] sm:$0xf]
      %v861 = vld [vmem:[%s1 + $0x4] sm:$0xf]
      %v862 = vld [vmem:[%s1 + $0x8] sm:$0xf]
      %v863 = vld [vmem:[%s1 + $0xc] sm:$0x3]
      %v868 = vunpack.c.l.b16 %v860
      %v869 = vunpack.c.l.b16 %v861
      %v870 = vunpack.c.l.b16 %v862
      %v871 = vunpack.c.l.b16 %v863
      %v872 = vpack.c.b16 %v869, %v868
      %v873 = vpack.c.b16 %v871, %v870
      %v874 = vpack.i.b16 %v780, %v779
      %v875 = vpack.i.b16 %v782, %v781
      %v876 = vpack.i.b16 %v784, %v783
      %v877 = vpack.i.b16 %v786, %v785
      %v878 = vpack.i.b16 %v788, %v787
      %v879 = vpack.i.b16 %v790, %v789
      %v880 = vpack.i.b16 %v792, %v791
      %v881 = vpack.i.b16 %v794, %v793
      %v882 = vpack.i.b16 %v796, %v795
      %v883 = vpack.i.b16 %v798, %v797
      %v884 = vpack.i.b16 %v800, %v799
      %v885 = vpack.i.b16 %v802, %v801
      %v886 = vpack.i.b16 %v804, %v803
      %v887 = vpack.i.b16 %v806, %v805
      %v888 = vpack.i.b16 %v808, %v807
      %v889 = vpack.i.b16 %v810, %v809
      %v890 = vpack.i.b16 %v812, %v811
      %v891 = vpack.i.b16 %v814, %v813
      %v892 = vpack.i.b16 %v816, %v815
      %v893 = vpack.i.b16 %v818, %v817
      %v894 = vpack.i.b16 %v820, %v819
      %v895 = vpack.i.b16 %v822, %v821
      %v896 = vpack.i.b16 %v824, %v823
      %v897 = vpack.i.b16 %v826, %v825
      %v898 = vpack.i.b16 %v828, %v827
      %v899 = vpack.i.b16 %v830, %v829
      %v900 = vpack.i.b16 %v832, %v831
      %v901 = vpack.i.b16 %v834, %v833
      %v902 = vpack.i.b16 %v836, %v835
      %v903 = vpack.i.b16 %v838, %v837
      %v904 = vpack.i.b16 %v840, %v839
      %v905 = vpack.i.b16 %v842, %v841
      %v906 = vpack.i.b16 %v844, %v843
      %v907 = vpack.i.b16 %v846, %v845
      %v908 = vpack.i.b16 %v848, %v847
      %v909 = vpack.i.b16 %v850, %v849
      %v910 = vpack.i.b16 %v852, %v851
      %v911 = vpack.i.b16 %v854, %v853
      %v912 = vpack.i.b16 %v856, %v855
      %v913 = vpack.i.b16 %v858, %v857
      %v915 = vcombine.low %v874, %v875
      %v916 = vcombine.low %v876, %v877
      %v917 = vcombine.low %v878, %v879
      %v918 = vcombine.low %v880, %v881
      %v920 = vunpack.c.l.s4 1966171168
      %v921 = vunpack.c.0.s8 %v920
      %v922 = vlaneseq
      %v923 = vshrl.u32 %v922, 7
      %v924 = vsub.s32 %v921, %v923
      %v925 = vrot.slane %v915, %v924
      %v927 = vunpack.c.l.s4 1966171168
      %v928 = vunpack.c.0.s8 %v927
      %v929 = vlaneseq
      %v930 = vshrl.u32 %v929, 7
      %v931 = vsub.s32 %v928, %v930
      %v932 = vrot.slane %v916, %v931
      %v934 = vunpack.c.l.s4 1966171168
      %v935 = vunpack.c.0.s8 %v934
      %v936 = vlaneseq
      %v937 = vshrl.u32 %v936, 7
      %v938 = vsub.s32 %v935, %v937
      %v939 = vrot.slane %v917, %v938
      %v941 = vunpack.c.l.s4 1966171168
      %v942 = vunpack.c.0.s8 %v941
      %v943 = vlaneseq
      %v944 = vshrl.u32 %v943, 7
      %v945 = vsub.s32 %v942, %v944
      %v946 = vrot.slane %v918, %v945
      %v947 = vcombine.low %v925, %v932
      %v948 = vcombine.low %v939, %v946
      %v950 = vunpack.c.l.s4 1966171168
      %v951 = vunpack.c.0.s8 %v950
      %v952 = vlaneseq
      %v953 = vshrl.u32 %v952, 7
      %v954 = vsub.s32 %v951, %v953
      %v955 = vrot.slane %v947, %v954
      %v957 = vunpack.c.l.s4 1966171168
      %v958 = vunpack.c.0.s8 %v957
      %v959 = vlaneseq
      %v960 = vshrl.u32 %v959, 7
      %v961 = vsub.s32 %v958, %v960
      %v962 = vrot.slane %v948, %v961
      %v963 = vcombine.low %v955, %v962
      %v964 = vcombine.low %v882, %v883
      %v965 = vcombine.low %v884, %v885
      %v966 = vcombine.low %v886, %v887
      %v967 = vcombine.low %v888, %v889
      %v969 = vunpack.c.l.s4 1966171168
      %v970 = vunpack.c.0.s8 %v969
      %v971 = vlaneseq
      %v972 = vshrl.u32 %v971, 7
      %v973 = vsub.s32 %v970, %v972
      %v974 = vrot.slane %v964, %v973
      %v976 = vunpack.c.l.s4 1966171168
      %v977 = vunpack.c.0.s8 %v976
      %v978 = vlaneseq
      %v979 = vshrl.u32 %v978, 7
      %v980 = vsub.s32 %v977, %v979
      %v981 = vrot.slane %v965, %v980
      %v983 = vunpack.c.l.s4 1966171168
      %v984 = vunpack.c.0.s8 %v983
      %v985 = vlaneseq
      %v986 = vshrl.u32 %v985, 7
      %v987 = vsub.s32 %v984, %v986
      %v988 = vrot.slane %v966, %v987
      %v990 = vunpack.c.l.s4 1966171168
      %v991 = vunpack.c.0.s8 %v990
      %v992 = vlaneseq
      %v993 = vshrl.u32 %v992, 7
      %v994 = vsub.s32 %v991, %v993
      %v995 = vrot.slane %v967, %v994
      %v996 = vcombine.low %v974, %v981
      %v997 = vcombine.low %v988, %v995
      %v999 = vunpack.c.l.s4 1966171168
      %v1000 = vunpack.c.0.s8 %v999
      %v1001 = vlaneseq
      %v1002 = vshrl.u32 %v1001, 7
      %v1003 = vsub.s32 %v1000, %v1002
      %v1004 = vrot.slane %v996, %v1003
      %v1006 = vunpack.c.l.s4 1966171168
      %v1007 = vunpack.c.0.s8 %v1006
      %v1008 = vlaneseq
      %v1009 = vshrl.u32 %v1008, 7
      %v1010 = vsub.s32 %v1007, %v1009
      %v1011 = vrot.slane %v997, %v1010
      %v1012 = vcombine.low %v1004, %v1011
      %v1013 = vcombine.low %v890, %v891
      %v1014 = vcombine.low %v892, %v893
      %v1015 = vcombine.low %v894, %v895
      %v1016 = vcombine.low %v896, %v897
      %v1018 = vunpack.c.l.s4 1966171168
      %v1019 = vunpack.c.0.s8 %v1018
      %v1020 = vlaneseq
      %v1021 = vshrl.u32 %v1020, 7
      %v1022 = vsub.s32 %v1019, %v1021
      %v1023 = vrot.slane %v1013, %v1022
      %v1025 = vunpack.c.l.s4 1966171168
      %v1026 = vunpack.c.0.s8 %v1025
      %v1027 = vlaneseq
      %v1028 = vshrl.u32 %v1027, 7
      %v1029 = vsub.s32 %v1026, %v1028
      %v1030 = vrot.slane %v1014, %v1029
      %v1032 = vunpack.c.l.s4 1966171168
      %v1033 = vunpack.c.0.s8 %v1032
      %v1034 = vlaneseq
      %v1035 = vshrl.u32 %v1034, 7
      %v1036 = vsub.s32 %v1033, %v1035
      %v1037 = vrot.slane %v1015, %v1036
      %v1039 = vunpack.c.l.s4 1966171168
      %v1040 = vunpack.c.0.s8 %v1039
      %v1041 = vlaneseq
      %v1042 = vshrl.u32 %v1041, 7
      %v1043 = vsub.s32 %v1040, %v1042
      %v1044 = vrot.slane %v1016, %v1043
      %v1045 = vcombine.low %v1023, %v1030
      %v1046 = vcombine.low %v1037, %v1044
      %v1048 = vunpack.c.l.s4 1966171168
      %v1049 = vunpack.c.0.s8 %v1048
      %v1050 = vlaneseq
      %v1051 = vshrl.u32 %v1050, 7
      %v1052 = vsub.s32 %v1049, %v1051
      %v1053 = vrot.slane %v1045, %v1052
      %v1055 = vunpack.c.l.s4 1966171168
      %v1056 = vunpack.c.0.s8 %v1055
      %v1057 = vlaneseq
      %v1058 = vshrl.u32 %v1057, 7
      %v1059 = vsub.s32 %v1056, %v1058
      %v1060 = vrot.slane %v1046, %v1059
      %v1061 = vcombine.low %v1053, %v1060
      %v1062 = vcombine.low %v898, %v899
      %v1063 = vcombine.low %v900, %v901
      %v1064 = vcombine.low %v902, %v903
      %v1065 = vcombine.low %v904, %v905
      %v1067 = vunpack.c.l.s4 1966171168
      %v1068 = vunpack.c.0.s8 %v1067
      %v1069 = vlaneseq
      %v1070 = vshrl.u32 %v1069, 7
      %v1071 = vsub.s32 %v1068, %v1070
      %v1072 = vrot.slane %v1062, %v1071
      %v1074 = vunpack.c.l.s4 1966171168
      %v1075 = vunpack.c.0.s8 %v1074
      %v1076 = vlaneseq
      %v1077 = vshrl.u32 %v1076, 7
      %v1078 = vsub.s32 %v1075, %v1077
      %v1079 = vrot.slane %v1063, %v1078
      %v1081 = vunpack.c.l.s4 1966171168
      %v1082 = vunpack.c.0.s8 %v1081
      %v1083 = vlaneseq
      %v1084 = vshrl.u32 %v1083, 7
      %v1085 = vsub.s32 %v1082, %v1084
      %v1086 = vrot.slane %v1064, %v1085
      %v1088 = vunpack.c.l.s4 1966171168
      %v1089 = vunpack.c.0.s8 %v1088
      %v1090 = vlaneseq
      %v1091 = vshrl.u32 %v1090, 7
      %v1092 = vsub.s32 %v1089, %v1091
      %v1093 = vrot.slane %v1065, %v1092
      %v1094 = vcombine.low %v1072, %v1079
      %v1095 = vcombine.low %v1086, %v1093
      %v1097 = vunpack.c.l.s4 1966171168
      %v1098 = vunpack.c.0.s8 %v1097
      %v1099 = vlaneseq
      %v1100 = vshrl.u32 %v1099, 7
      %v1101 = vsub.s32 %v1098, %v1100
      %v1102 = vrot.slane %v1094, %v1101
      %v1104 = vunpack.c.l.s4 1966171168
      %v1105 = vunpack.c.0.s8 %v1104
      %v1106 = vlaneseq
      %v1107 = vshrl.u32 %v1106, 7
      %v1108 = vsub.s32 %v1105, %v1107
      %v1109 = vrot.slane %v1095, %v1108
      %v1110 = vcombine.low %v1102, %v1109
      %v1111 = vcombine.low %v906, %v907
      %v1112 = vcombine.low %v908, %v909
      %v1113 = vcombine.low %v910, %v911
      %v1114 = vcombine.low %v912, %v913
      %v1116 = vunpack.c.l.s4 1966171168
      %v1117 = vunpack.c.0.s8 %v1116
      %v1118 = vlaneseq
      %v1119 = vshrl.u32 %v1118, 7
      %v1120 = vsub.s32 %v1117, %v1119
      %v1121 = vrot.slane %v1111, %v1120
      %v1123 = vunpack.c.l.s4 1966171168
      %v1124 = vunpack.c.0.s8 %v1123
      %v1125 = vlaneseq
      %v1126 = vshrl.u32 %v1125, 7
      %v1127 = vsub.s32 %v1124, %v1126
      %v1128 = vrot.slane %v1112, %v1127
      %v1130 = vunpack.c.l.s4 1966171168
      %v1131 = vunpack.c.0.s8 %v1130
      %v1132 = vlaneseq
      %v1133 = vshrl.u32 %v1132, 7
      %v1134 = vsub.s32 %v1131, %v1133
      %v1135 = vrot.slane %v1113, %v1134
      %v1137 = vunpack.c.l.s4 1966171168
      %v1138 = vunpack.c.0.s8 %v1137
      %v1139 = vlaneseq
      %v1140 = vshrl.u32 %v1139, 7
      %v1141 = vsub.s32 %v1138, %v1140
      %v1142 = vrot.slane %v1114, %v1141
      %v1143 = vcombine.low %v1121, %v1128
      %v1144 = vcombine.low %v1135, %v1142
      %v1146 = vunpack.c.l.s4 1966171168
      %v1147 = vunpack.c.0.s8 %v1146
      %v1148 = vlaneseq
      %v1149 = vshrl.u32 %v1148, 7
      %v1150 = vsub.s32 %v1147, %v1149
      %v1151 = vrot.slane %v1143, %v1150
      %v1153 = vunpack.c.l.s4 1966171168
      %v1154 = vunpack.c.0.s8 %v1153
      %v1155 = vlaneseq
      %v1156 = vshrl.u32 %v1155, 7
      %v1157 = vsub.s32 %v1154, %v1156
      %v1158 = vrot.slane %v1144, %v1157
      %v1159 = vcombine.low %v1151, %v1158
      %v1161 = vunpack.c.l.s4 1966171168
      %v1162 = vunpack.c.0.s8 %v1161
      %v1163 = vlaneseq
      %v1164 = vshrl.u32 %v1163, 7
      %v1165 = vsub.s32 %v1162, %v1164
      %v1166 = vrot.slane %v859, %v1165
      %v1168 = vunpack.c.l.s4 1966171168
      %v1169 = vunpack.c.0.s8 %v1168
      %v1170 = vlaneseq
      %v1171 = vshrl.u32 %v1170, 7
      %v1172 = vsub.s32 %v1169, %v1171
      %v1173 = vrot.slane %v1166, %v1172
      %vm1179 = vcmask 662528
      %v1181 = vsel %vm1179, %v872, 0
      %v1184 = vsel %vm1179, %v873, 0
      %vm1186 = vcmask 1040384
      %v1187 = vsel 0, 4294967295, 65535
      %v1188 = vsel %vm1186, %v1187, 0
      %v1190 = vand.u32 %v1173, %v1188
      %1192 = vmatprep.subr.bf16.mxu0 0
      %1193 = vmatpush1.bf16.msra.mxu0 0
      %1194 = vmatprep.subr.bf16.mxu0 0
      %1195 = vmatpush1.bf16.msra.mxu0 0
      %1196 = vmatprep.subr.bf16.mxu0 0
      %1197 = vmatpush1.bf16.msra.mxu0 %v1190
      %1198 = vmatprep.subr.bf16.mxu0 0
      %1199 = vmatpush1.bf16.msra.mxu0 %v1159
      %1200 = vmatprep.subr.bf16.mxu0 0
      %1201 = vmatpush1.bf16.msra.mxu0 %v1110
      %1202 = vmatprep.subr.bf16.mxu0 0
      %1203 = vmatpush1.bf16.msra.mxu0 %v1061
      %1204 = vmatprep.subr.bf16.mxu0 0
      %1205 = vmatpush1.bf16.msra.mxu0 %v1012
      %1206 = vmatprep.subr.bf16.mxu0 0
      %1207 = vmatpush1.bf16.msra.mxu0 %v963
      %1208 = vmatprep.subr.bf16.mxu0 0
      %1209 = vmatpush2.bf16.msra.mxu0 0
      %1210 = vmatprep.subr.bf16.mxu0 0
      %1211 = vmatpush2.bf16.msra.mxu0 0
      %1212 = vmatprep.subr.bf16.mxu0 0
      %1213 = vmatpush2.bf16.msra.mxu0 0
      %1214 = vmatprep.subr.bf16.mxu0 0
      %1215 = vmatpush2.bf16.msra.mxu0 0
      %1216 = vmatprep.subr.bf16.mxu0 0
      %1217 = vmatpush2.bf16.msra.mxu0 0
      %1218 = vmatprep.subr.bf16.mxu0 0
      %1219 = vmatpush2.bf16.msra.mxu0 0
      %1220 = vmatprep.subr.bf16.mxu0 0
      %1221 = vmatpush2.bf16.msra.mxu0 0
      %1222 = vmatprep.subr.bf16.mxu0 0
      %1223 = vmatpush2.bf16.msra.mxu0 0
      %1224 = vmatprep.mubr.bf16.mxu0 0
      %1225 = vmatmul.mubr.bf16.gmra.mxu0 %v1181
      %v1226 = vpop.f32.mrf.mxu0
      %v1227 = vadd.f32 0.0, %v1226
      %v1228 = vpop.f32.mrf.mxu0
      %v1229 = vpop.f32.mrf.mxu0
      %v1230 = vadd.f32 0.0, %v1229
      %v1231 = vpop.f32.mrf.mxu0
      %1232 = vmatprep.mubr.bf16.mxu0 0
      %1233 = vmatmul.mubr.bf16.gmra.mxu0 %v1184
      %v1234 = vpop.f32.mrf.mxu0
      %v1235 = vadd.f32 0.0, %v1234
      %v1236 = vpop.f32.mrf.mxu0
      %v1237 = vpop.f32.mrf.mxu0
      %v1238 = vadd.f32 0.0, %v1237
      %v1239 = vpop.f32.mrf.mxu0
      %1240 = vdwg.mxu0
      %v1245 = vcombine.high %v1227, %v1227
      %v1247 = vunpack.c.l.s4 1966171168
      %v1248 = vunpack.c.0.s8 %v1247
      %v1249 = vlaneseq
      %v1250 = vshrl.u32 %v1249, 7
      %v1251 = vsub.s32 %v1248, %v1250
      %v1252 = vrot.slane %v1227, %v1251
      %v1254 = vunpack.c.l.s4 1966171168
      %v1255 = vunpack.c.0.s8 %v1254
      %v1256 = vlaneseq
      %v1257 = vshrl.u32 %v1256, 7
      %v1258 = vsub.s32 %v1255, %v1257
      %v1259 = vrot.slane %v1245, %v1258
      %v1260 = vcombine.high %v1252, %v1252
      %v1261 = vcombine.high %v1259, %v1259
      %v1263 = vunpack.c.l.s4 1966171168
      %v1264 = vunpack.c.0.s8 %v1263
      %v1265 = vlaneseq
      %v1266 = vshrl.u32 %v1265, 7
      %v1267 = vsub.s32 %v1264, %v1266
      %v1268 = vrot.slane %v1252, %v1267
      %v1270 = vunpack.c.l.s4 1966171168
      %v1271 = vunpack.c.0.s8 %v1270
      %v1272 = vlaneseq
      %v1273 = vshrl.u32 %v1272, 7
      %v1274 = vsub.s32 %v1271, %v1273
      %v1275 = vrot.slane %v1259, %v1274
      %v1277 = vunpack.c.l.s4 1966171168
      %v1278 = vunpack.c.0.s8 %v1277
      %v1279 = vlaneseq
      %v1280 = vshrl.u32 %v1279, 7
      %v1281 = vsub.s32 %v1278, %v1280
      %v1282 = vrot.slane %v1260, %v1281
      %v1284 = vunpack.c.l.s4 1966171168
      %v1285 = vunpack.c.0.s8 %v1284
      %v1286 = vlaneseq
      %v1287 = vshrl.u32 %v1286, 7
      %v1288 = vsub.s32 %v1285, %v1287
      %v1289 = vrot.slane %v1261, %v1288
      %v1290 = vcombine.high %v1268, %v1268
      %v1291 = vcombine.high %v1275, %v1275
      %v1292 = vcombine.high %v1282, %v1282
      %v1293 = vcombine.high %v1289, %v1289
      %v1294 = vcombine.high %v1230, %v1230
      %v1296 = vunpack.c.l.s4 1966171168
      %v1297 = vunpack.c.0.s8 %v1296
      %v1298 = vlaneseq
      %v1299 = vshrl.u32 %v1298, 7
      %v1300 = vsub.s32 %v1297, %v1299
      %v1301 = vrot.slane %v1230, %v1300
      %v1303 = vunpack.c.l.s4 1966171168
      %v1304 = vunpack.c.0.s8 %v1303
      %v1305 = vlaneseq
      %v1306 = vshrl.u32 %v1305, 7
      %v1307 = vsub.s32 %v1304, %v1306
      %v1308 = vrot.slane %v1294, %v1307
      %v1309 = vcombine.high %v1301, %v1301
      %v1310 = vcombine.high %v1308, %v1308
      %v1312 = vunpack.c.l.s4 1966171168
      %v1313 = vunpack.c.0.s8 %v1312
      %v1314 = vlaneseq
      %v1315 = vshrl.u32 %v1314, 7
      %v1316 = vsub.s32 %v1313, %v1315
      %v1317 = vrot.slane %v1301, %v1316
      %v1319 = vunpack.c.l.s4 1966171168
      %v1320 = vunpack.c.0.s8 %v1319
      %v1321 = vlaneseq
      %v1322 = vshrl.u32 %v1321, 7
      %v1323 = vsub.s32 %v1320, %v1322
      %v1324 = vrot.slane %v1308, %v1323
      %v1326 = vunpack.c.l.s4 1966171168
      %v1327 = vunpack.c.0.s8 %v1326
      %v1328 = vlaneseq
      %v1329 = vshrl.u32 %v1328, 7
      %v1330 = vsub.s32 %v1327, %v1329
      %v1331 = vrot.slane %v1309, %v1330
      %v1333 = vunpack.c.l.s4 1966171168
      %v1334 = vunpack.c.0.s8 %v1333
      %v1335 = vlaneseq
      %v1336 = vshrl.u32 %v1335, 7
      %v1337 = vsub.s32 %v1334, %v1336
      %v1338 = vrot.slane %v1310, %v1337
      %v1339 = vcombine.high %v1317, %v1317
      %v1340 = vcombine.high %v1324, %v1324
      %v1341 = vcombine.high %v1331, %v1331
      %v1342 = vcombine.high %v1338, %v1338
      %v1343 = vcombine.high %v1235, %v1235
      %v1345 = vunpack.c.l.s4 1966171168
      %v1346 = vunpack.c.0.s8 %v1345
      %v1347 = vlaneseq
      %v1348 = vshrl.u32 %v1347, 7
      %v1349 = vsub.s32 %v1346, %v1348
      %v1350 = vrot.slane %v1235, %v1349
      %v1352 = vunpack.c.l.s4 1966171168
      %v1353 = vunpack.c.0.s8 %v1352
      %v1354 = vlaneseq
      %v1355 = vshrl.u32 %v1354, 7
      %v1356 = vsub.s32 %v1353, %v1355
      %v1357 = vrot.slane %v1343, %v1356
      %v1358 = vcombine.high %v1350, %v1350
      %v1359 = vcombine.high %v1357, %v1357
      %v1361 = vunpack.c.l.s4 1966171168
      %v1362 = vunpack.c.0.s8 %v1361
      %v1363 = vlaneseq
      %v1364 = vshrl.u32 %v1363, 7
      %v1365 = vsub.s32 %v1362, %v1364
      %v1366 = vrot.slane %v1350, %v1365
      %v1368 = vunpack.c.l.s4 1966171168
      %v1369 = vunpack.c.0.s8 %v1368
      %v1370 = vlaneseq
      %v1371 = vshrl.u32 %v1370, 7
      %v1372 = vsub.s32 %v1369, %v1371
      %v1373 = vrot.slane %v1357, %v1372
      %v1375 = vunpack.c.l.s4 1966171168
      %v1376 = vunpack.c.0.s8 %v1375
      %v1377 = vlaneseq
      %v1378 = vshrl.u32 %v1377, 7
      %v1379 = vsub.s32 %v1376, %v1378
      %v1380 = vrot.slane %v1358, %v1379
      %v1382 = vunpack.c.l.s4 1966171168
      %v1383 = vunpack.c.0.s8 %v1382
      %v1384 = vlaneseq
      %v1385 = vshrl.u32 %v1384, 7
      %v1386 = vsub.s32 %v1383, %v1385
      %v1387 = vrot.slane %v1359, %v1386
      %v1388 = vcombine.high %v1366, %v1366
      %v1389 = vcombine.high %v1373, %v1373
      %v1390 = vcombine.high %v1380, %v1380
      %v1391 = vcombine.high %v1387, %v1387
      %v1393 = vunpack.c.l.s4 1966171168
      %v1394 = vunpack.c.0.s8 %v1393
      %v1395 = vlaneseq
      %v1396 = vshrl.u32 %v1395, 7
      %v1397 = vsub.s32 %v1394, %v1396
      %v1398 = vrot.slane %v1238, %v1397
      %v1399 = vcombine.high %v1398, %v1398
      %v1401 = vunpack.c.l.s4 1966171168
      %v1402 = vunpack.c.0.s8 %v1401
      %v1403 = vlaneseq
      %v1404 = vshrl.u32 %v1403, 7
      %v1405 = vsub.s32 %v1402, %v1404
      %v1406 = vrot.slane %v1398, %v1405
      %v1408 = vunpack.c.l.s4 1966171168
      %v1409 = vunpack.c.0.s8 %v1408
      %v1410 = vlaneseq
      %v1411 = vshrl.u32 %v1410, 7
      %v1412 = vsub.s32 %v1409, %v1411
      %v1413 = vrot.slane %v1399, %v1412
      %v1414 = vcombine.high %v1406, %v1406
      %v1444 = vcombine.high %v205, %v205
      %v1446 = vunpack.c.l.s4 1966171168
      %v1447 = vunpack.c.0.s8 %v1446
      %v1448 = vlaneseq
      %v1449 = vshrl.u32 %v1448, 7
      %v1450 = vsub.s32 %v1447, %v1449
      %v1451 = vrot.slane %v205, %v1450
      %v1453 = vunpack.c.l.s4 1966171168
      %v1454 = vunpack.c.0.s8 %v1453
      %v1455 = vlaneseq
      %v1456 = vshrl.u32 %v1455, 7
      %v1457 = vsub.s32 %v1454, %v1456
      %v1458 = vrot.slane %v1444, %v1457
      %v1459 = vcombine.high %v1451, %v1451
      %v1460 = vcombine.high %v1458, %v1458
      %v1462 = vunpack.c.l.s4 1966171168
      %v1463 = vunpack.c.0.s8 %v1462
      %v1464 = vlaneseq
      %v1465 = vshrl.u32 %v1464, 7
      %v1466 = vsub.s32 %v1463, %v1465
      %v1467 = vrot.slane %v1451, %v1466
      %v1469 = vunpack.c.l.s4 1966171168
      %v1470 = vunpack.c.0.s8 %v1469
      %v1471 = vlaneseq
      %v1472 = vshrl.u32 %v1471, 7
      %v1473 = vsub.s32 %v1470, %v1472
      %v1474 = vrot.slane %v1458, %v1473
      %v1476 = vunpack.c.l.s4 1966171168
      %v1477 = vunpack.c.0.s8 %v1476
      %v1478 = vlaneseq
      %v1479 = vshrl.u32 %v1478, 7
      %v1480 = vsub.s32 %v1477, %v1479
      %v1481 = vrot.slane %v1459, %v1480
      %v1483 = vunpack.c.l.s4 1966171168
      %v1484 = vunpack.c.0.s8 %v1483
      %v1485 = vlaneseq
      %v1486 = vshrl.u32 %v1485, 7
      %v1487 = vsub.s32 %v1484, %v1486
      %v1488 = vrot.slane %v1460, %v1487
      %v1489 = vcombine.high %v1467, %v1467
      %v1490 = vcombine.high %v1474, %v1474
      %v1491 = vcombine.high %v1481, %v1481
      %v1492 = vcombine.high %v1488, %v1488
      %v1494 = vunpack.c.l.s4 1966171168
      %v1495 = vunpack.c.0.s8 %v1494
      %v1496 = vlaneseq
      %v1497 = vshrl.u32 %v1496, 7
      %v1498 = vsub.s32 %v1495, %v1497
      %v1499 = vrot.slane %v206, %v1498
      %v1501 = vunpack.c.l.s4 1966171168
      %v1502 = vunpack.c.0.s8 %v1501
      %v1503 = vlaneseq
      %v1504 = vshrl.u32 %v1503, 7
      %v1505 = vsub.s32 %v1502, %v1504
      %v1506 = vrot.slane %v1499, %v1505
      %v1516 = vmul.f32 %v1268, %v1467
      %v1517 = vmul.f32 %v1282, %v1481
      %v1518 = vmul.f32 %v1290, %v1489
      %v1519 = vmul.f32 %v1292, %v1491
      %v1520 = vmul.f32 %v1275, %v1474
      %v1521 = vmul.f32 %v1289, %v1488
      %v1522 = vmul.f32 %v1291, %v1490
      %v1523 = vmul.f32 %v1293, %v1492
      %v1524 = vmul.f32 %v1317, %v1506
      %v1525 = vmul.f32 %v1331, %v1467
      %v1526 = vmul.f32 %v1339, %v1481
      %v1527 = vmul.f32 %v1341, %v1489
      %v1528 = vmul.f32 %v1324, %v1491
      %v1529 = vmul.f32 %v1338, %v1474
      %v1530 = vmul.f32 %v1340, %v1488
      %v1531 = vmul.f32 %v1342, %v1490
      %v1532 = vmul.f32 %v1366, %v1492
      %v1533 = vmul.f32 %v1380, %v1506
      %v1534 = vmul.f32 %v1388, %v1467
      %v1535 = vmul.f32 %v1390, %v1481
      %v1536 = vmul.f32 %v1373, %v1489
      %v1537 = vmul.f32 %v1387, %v1491
      %v1538 = vmul.f32 %v1389, %v1474
      %v1539 = vmul.f32 %v1391, %v1488
      %v1540 = vmul.f32 %v1406, %v1490
      %v1541 = vmul.f32 %v1413, %v1492
      %v1542 = vmul.f32 %v1414, %v1506
      %v1570 = vcombine.low %v1516, %v1517
      %v1571 = vcombine.low %v1518, %v1519
      %v1572 = vcombine.low %v1520, %v1521
      %v1573 = vcombine.low %v1522, %v1523
      %v1575 = vunpack.c.l.s4 1966171168
      %v1576 = vunpack.c.0.s8 %v1575
      %v1577 = vlaneseq
      %v1578 = vshrl.u32 %v1577, 7
      %v1579 = vsub.s32 %v1576, %v1578
      %v1580 = vrot.slane %v1570, %v1579
      %v1582 = vunpack.c.l.s4 1966171168
      %v1583 = vunpack.c.0.s8 %v1582
      %v1584 = vlaneseq
      %v1585 = vshrl.u32 %v1584, 7
      %v1586 = vsub.s32 %v1583, %v1585
      %v1587 = vrot.slane %v1571, %v1586
      %v1589 = vunpack.c.l.s4 1966171168
      %v1590 = vunpack.c.0.s8 %v1589
      %v1591 = vlaneseq
      %v1592 = vshrl.u32 %v1591, 7
      %v1593 = vsub.s32 %v1590, %v1592
      %v1594 = vrot.slane %v1572, %v1593
      %v1596 = vunpack.c.l.s4 1966171168
      %v1597 = vunpack.c.0.s8 %v1596
      %v1598 = vlaneseq
      %v1599 = vshrl.u32 %v1598, 7
      %v1600 = vsub.s32 %v1597, %v1599
      %v1601 = vrot.slane %v1573, %v1600
      %v1602 = vcombine.low %v1580, %v1587
      %v1603 = vcombine.low %v1594, %v1601
      %v1605 = vunpack.c.l.s4 1966171168
      %v1606 = vunpack.c.0.s8 %v1605
      %v1607 = vlaneseq
      %v1608 = vshrl.u32 %v1607, 7
      %v1609 = vsub.s32 %v1606, %v1608
      %v1610 = vrot.slane %v1602, %v1609
      %v1612 = vunpack.c.l.s4 1966171168
      %v1613 = vunpack.c.0.s8 %v1612
      %v1614 = vlaneseq
      %v1615 = vshrl.u32 %v1614, 7
      %v1616 = vsub.s32 %v1613, %v1615
      %v1617 = vrot.slane %v1603, %v1616
      %v1618 = vcombine.low %v1610, %v1617
      %v1620 = vunpack.c.l.s4 1966171168
      %v1621 = vunpack.c.0.s8 %v1620
      %v1622 = vlaneseq
      %v1623 = vshrl.u32 %v1622, 7
      %v1624 = vsub.s32 %v1621, %v1623
      %v1625 = vrot.slane %v1524, %v1624
      %v1627 = vunpack.c.l.s4 1966171168
      %v1628 = vunpack.c.0.s8 %v1627
      %v1629 = vlaneseq
      %v1630 = vshrl.u32 %v1629, 7
      %v1631 = vsub.s32 %v1628, %v1630
      %v1632 = vrot.slane %v1625, %v1631
      %v1633 = vcombine.low %v1525, %v1526
      %v1634 = vcombine.low %v1527, %v1528
      %v1635 = vcombine.low %v1529, %v1530
      %v1636 = vcombine.low %v1531, %v1532
      %v1638 = vunpack.c.l.s4 1966171168
      %v1639 = vunpack.c.0.s8 %v1638
      %v1640 = vlaneseq
      %v1641 = vshrl.u32 %v1640, 7
      %v1642 = vsub.s32 %v1639, %v1641
      %v1643 = vrot.slane %v1633, %v1642
      %v1645 = vunpack.c.l.s4 1966171168
      %v1646 = vunpack.c.0.s8 %v1645
      %v1647 = vlaneseq
      %v1648 = vshrl.u32 %v1647, 7
      %v1649 = vsub.s32 %v1646, %v1648
      %v1650 = vrot.slane %v1634, %v1649
      %v1652 = vunpack.c.l.s4 1966171168
      %v1653 = vunpack.c.0.s8 %v1652
      %v1654 = vlaneseq
      %v1655 = vshrl.u32 %v1654, 7
      %v1656 = vsub.s32 %v1653, %v1655
      %v1657 = vrot.slane %v1635, %v1656
      %v1659 = vunpack.c.l.s4 1966171168
      %v1660 = vunpack.c.0.s8 %v1659
      %v1661 = vlaneseq
      %v1662 = vshrl.u32 %v1661, 7
      %v1663 = vsub.s32 %v1660, %v1662
      %v1664 = vrot.slane %v1636, %v1663
      %v1665 = vcombine.low %v1643, %v1650
      %v1666 = vcombine.low %v1657, %v1664
      %v1668 = vunpack.c.l.s4 1966171168
      %v1669 = vunpack.c.0.s8 %v1668
      %v1670 = vlaneseq
      %v1671 = vshrl.u32 %v1670, 7
      %v1672 = vsub.s32 %v1669, %v1671
      %v1673 = vrot.slane %v1665, %v1672
      %v1675 = vunpack.c.l.s4 1966171168
      %v1676 = vunpack.c.0.s8 %v1675
      %v1677 = vlaneseq
      %v1678 = vshrl.u32 %v1677, 7
      %v1679 = vsub.s32 %v1676, %v1678
      %v1680 = vrot.slane %v1666, %v1679
      %v1681 = vcombine.low %v1673, %v1680
      %v1683 = vunpack.c.l.s4 1966171168
      %v1684 = vunpack.c.0.s8 %v1683
      %v1685 = vlaneseq
      %v1686 = vshrl.u32 %v1685, 7
      %v1687 = vsub.s32 %v1684, %v1686
      %v1688 = vrot.slane %v1533, %v1687
      %v1690 = vunpack.c.l.s4 1966171168
      %v1691 = vunpack.c.0.s8 %v1690
      %v1692 = vlaneseq
      %v1693 = vshrl.u32 %v1692, 7
      %v1694 = vsub.s32 %v1691, %v1693
      %v1695 = vrot.slane %v1688, %v1694
      %v1696 = vcombine.low %v1534, %v1535
      %v1697 = vcombine.low %v1536, %v1537
      %v1698 = vcombine.low %v1538, %v1539
      %v1699 = vcombine.low %v1540, %v1541
      %v1701 = vunpack.c.l.s4 1966171168
      %v1702 = vunpack.c.0.s8 %v1701
      %v1703 = vlaneseq
      %v1704 = vshrl.u32 %v1703, 7
      %v1705 = vsub.s32 %v1702, %v1704
      %v1706 = vrot.slane %v1696, %v1705
      %v1708 = vunpack.c.l.s4 1966171168
      %v1709 = vunpack.c.0.s8 %v1708
      %v1710 = vlaneseq
      %v1711 = vshrl.u32 %v1710, 7
      %v1712 = vsub.s32 %v1709, %v1711
      %v1713 = vrot.slane %v1697, %v1712
      %v1715 = vunpack.c.l.s4 1966171168
      %v1716 = vunpack.c.0.s8 %v1715
      %v1717 = vlaneseq
      %v1718 = vshrl.u32 %v1717, 7
      %v1719 = vsub.s32 %v1716, %v1718
      %v1720 = vrot.slane %v1698, %v1719
      %v1722 = vunpack.c.l.s4 1966171168
      %v1723 = vunpack.c.0.s8 %v1722
      %v1724 = vlaneseq
      %v1725 = vshrl.u32 %v1724, 7
      %v1726 = vsub.s32 %v1723, %v1725
      %v1727 = vrot.slane %v1699, %v1726
      %v1728 = vcombine.low %v1706, %v1713
      %v1729 = vcombine.low %v1720, %v1727
      %v1731 = vunpack.c.l.s4 1966171168
      %v1732 = vunpack.c.0.s8 %v1731
      %v1733 = vlaneseq
      %v1734 = vshrl.u32 %v1733, 7
      %v1735 = vsub.s32 %v1732, %v1734
      %v1736 = vrot.slane %v1728, %v1735
      %v1738 = vunpack.c.l.s4 1966171168
      %v1739 = vunpack.c.0.s8 %v1738
      %v1740 = vlaneseq
      %v1741 = vshrl.u32 %v1740, 7
      %v1742 = vsub.s32 %v1739, %v1741
      %v1743 = vrot.slane %v1729, %v1742
      %v1744 = vcombine.low %v1736, %v1743
      %v1746 = vunpack.c.l.s4 1966171168
      %v1747 = vunpack.c.0.s8 %v1746
      %v1748 = vlaneseq
      %v1749 = vshrl.u32 %v1748, 7
      %v1750 = vsub.s32 %v1747, %v1749
      %v1751 = vrot.slane %v1542, %v1750
      %v1753 = vunpack.c.l.s4 1966171168
      %v1754 = vunpack.c.0.s8 %v1753
      %v1755 = vlaneseq
      %v1756 = vshrl.u32 %v1755, 7
      %v1757 = vsub.s32 %v1754, %v1756
      %v1758 = vrot.slane %v1751, %v1757
      %v1765 = vsel %vm1186, %v1632, 0.0
      %v1766 = vadd.f32 %v1618, %v1765
      %v1767 = vrot.slane %v1766, 4
      %v1768 = vadd.f32 %v1766, %v1767
      %v1769 = vrot.slane %v1768, 2
      %v1770 = vadd.f32 %v1768, %v1769
      %v1771 = vrot.slane %v1770, 1
      %v1772 = vadd.f32 %v1770, %v1771
      %v1773 = vsel %vm1186, %v1695, 0.0
      %v1774 = vadd.f32 %v1681, %v1773
      %v1775 = vrot.slane %v1774, 4
      %v1776 = vadd.f32 %v1774, %v1775
      %v1777 = vrot.slane %v1776, 2
      %v1778 = vadd.f32 %v1776, %v1777
      %v1779 = vrot.slane %v1778, 1
      %v1780 = vadd.f32 %v1778, %v1779
      %v1781 = vsel %vm1186, %v1758, 0.0
      %v1782 = vadd.f32 %v1744, %v1781
      %v1783 = vrot.slane %v1782, 4
      %v1784 = vadd.f32 %v1782, %v1783
      %v1785 = vrot.slane %v1784, 2
      %v1786 = vadd.f32 %v1784, %v1785
      %v1787 = vrot.slane %v1786, 1
      %v1788 = vadd.f32 %v1786, %v1787
      %vm1792 = vcmask 1041409
      %v1793 = vsel %vm1792, %v1780, %v1772
      %vm1794 = vcmask 1042434
      %v1795 = vsel %vm1794, %v1788, %v1793
      %1797 = vst [vmem:[%s174] sm:$0x7] %v1795
      %p1798 = scmp.lt.s32.totalorder %s17, 1
      %s1799 = scalar_select %p1798, %s17, 1
      %p1800 = scmp.lt.s32.totalorder %s18, 1
      %s1801 = scalar_select %p1800, %s18, 1
      %s1802 = smul.addr %s1799, 2
      %s1803 = sadd.s32 %s1801, %s1802
      %s1804 = smul.addr %s1803, 4
      %s1805 = scalar_lea.vmem %s2, %s1804
      // Predicated region
      $region29: #{tpu_custom_call.1} parent=27 // pred_check
        %p1806 = pneg %p94
      $region30: #{tpu_custom_call.1} parent=27 // pred_check_branch
        %1808 = sbr.rel (%p1806) target = $region32
      $region31: #{tpu_custom_call.1} parent=27 // pred_region
        _
      $region32: #{tpu_custom_call.1} parent=27 // pred_fallthru
        _
    $region28: #{tpu_custom_call.1} parent=5 // pred_fallthru
      _
    %p1809 = scmp.le.s32.totalorder 2, %s8
    // Predicated region
    $region33: #{tpu_custom_call.1} parent=5 // pred_check
      %p1810 = pneg %p1809
    $region34: #{tpu_custom_call.1} parent=5 // pred_check_branch
      %1812 = sbr.rel (%p1810) target = $region36
    $region35: #{tpu_custom_call.1} parent=5 // pred_region
      %s1813 = ssub.s32 %s8, 2
      // Predicated region
      $region37: #{tpu_custom_call.1} parent=35 // pred_check
        %p1814 = pneg %p100
      $region38: #{tpu_custom_call.1} parent=35 // pred_check_branch
        %1816 = sbr.rel (%p1814) target = $region40
      $region39: #{tpu_custom_call.1} parent=35 // pred_region
        %p1817 = scmp.lt.s32.totalorder %s19, 1
        %s1818 = scalar_select %p1817, %s19, 1
        %p1819 = scmp.lt.s32.totalorder %s20, 1
        %s1820 = scalar_select %p1819, %s20, 1
        %s1821 = smul.addr %s1818, 2
        %s1822 = sadd.s32 %s1820, %s1821
        %s1823 = smul.addr %s1822, 4
        %s1824 = scalar_lea.vmem %s2, %s1823
      $region40: #{tpu_custom_call.1} parent=35 // pred_fallthru
        _
    $region36: #{tpu_custom_call.1} parent=5 // pred_fallthru
      _
  $region6: #{tpu_custom_call.1} parent=0 // loop_footer
    %s12 = sadd.s32 1, %s8
  $region7: #{tpu_custom_call.1} parent=0 // loop_footer_branch
    %7 = sbr.rel target = $region3
  $region8: #{tpu_custom_call.1} parent=0 // loop_exit
    _

</llo_original>
